<compile_context>
chip_gen: v6e
topology: v6e:2x2x1
jax: 0.10.0
libtpu: 0.0.40
codegen_flags: <defaults>
</compile_context>

<pallas_src>
import jax
import jax.numpy as jnp
from jax import lax
from jax.experimental import pallas as pl
from jax.experimental.pallas import tpu as pltpu


def bottleneck_kernel(x_ref, w1_ref, s1_ref, b1_ref,
                      w2_ref, s2_ref, b2_ref,
                      w3_ref, s3_ref, b3_ref, out_ref):
    # x_ref   : (1, H+2, W, Cin) f32  -- zero-row-padded image, resident per n
    # w1_ref  : (Cin, Cmid)      bf16
    # w2_ref  : (9*Cmid, Cmid)   bf16 -- 3x3 filter flattened (dy, dx, cin)-major
    # w3_ref  : (Cmid, Cout)     bf16
    # s*/b*   : (1, C)           f32  -- folded BN scale / bias
    # out_ref : (1, TH, W, Cout) f32
    _, Hp2, W, Cin = x_ref.shape
    TH = out_ref.shape[1]
    Cmid = w1_ref.shape[1]
    Cout = w3_ref.shape[1]

    i = pl.program_id(1)
    n_tiles = pl.num_programs(1)

    # Rows [i*TH, i*TH + TH + 2) of the padded image: TH output rows + halo.
    row0 = pl.multiple_of(i * TH, TH)
    xb = x_ref[0, pl.ds(row0, TH + 2)]                        # (TH+2, W, Cin) f32

    # ---- conv1 (1x1) + BN1 + ReLU (computed on the halo rows too) ----
    x2d = xb.reshape((TH + 2) * W, Cin)
    t1 = jnp.dot(x2d.astype(jnp.bfloat16), w1_ref[...],
                 preferred_element_type=jnp.float32)          # f32 accumulation
    t1 = jnp.maximum(t1 * s1_ref[...] + b1_ref[...], 0.0)
    t1_img = t1.reshape(TH + 2, W, Cmid)

    # conv2 zero-pads its *input* (post BN1/ReLU), so halo rows that fall on the
    # global image border must be exact zeros (relu(bn1(0)) is generally not 0).
    r_idx = lax.broadcasted_iota(jnp.int32, (TH + 2, 1, 1), 0)
    border = ((r_idx == 0) & (i == 0)) | ((r_idx == TH + 1) & (i == n_tiles - 1))
    t1_img = jnp.where(border, 0.0, t1_img)

    # ---- conv2 (3x3, stride=1, pad=1) as a single im2col matmul, K = 9*Cmid ----
    t1b = t1_img.astype(jnp.bfloat16)
    zcol = jnp.zeros((TH + 2, 1, Cmid), jnp.bfloat16)
    t1p = jnp.concatenate([zcol, t1b, zcol], axis=1)          # (TH+2, W+2, Cmid)
    taps = [None] * 9
    for dx in range(3):                                       # 3 sublane shifts total
        strip = t1p[:, dx:dx + W, :]                          # (TH+2, W, Cmid)
        for dy in range(3):                                   # row slices are ~free
            taps[dy * 3 + dx] = strip[dy:dy + TH]
    im2col = jnp.concatenate(taps, axis=-1).reshape(TH * W, 9 * Cmid)
    t2 = jnp.dot(im2col, w2_ref[...], preferred_element_type=jnp.float32)
    t2 = jnp.maximum(t2 * s2_ref[...] + b2_ref[...], 0.0)

    # ---- conv3 (1x1) + BN3 ----
    t3 = jnp.dot(t2.astype(jnp.bfloat16), w3_ref[...],
                 preferred_element_type=jnp.float32)
    t3 = t3 * s3_ref[...] + b3_ref[...]

    # ---- residual add + ReLU (identity shortcut: downsample=None, stride=1) ----
    res = xb[1:TH + 1].reshape(TH * W, Cin)
    out = jnp.maximum(t3 + res, 0.0)
    out_ref[...] = out.reshape(1, TH, W, Cout).astype(out_ref.dtype)


def _pick_row_tile(H, W, Cin, Cmid, Cout, budget_bytes=6 << 20):
    """Largest divisor of H whose per-tile intermediates fit in a VMEM budget.

    Bigger tiles amortize the 1-row halo (conv1 on halo rows is recomputed per
    tile) and reduce per-grid-step overhead; for small images this collapses to
    a single tile per batch element.
    """
    for th in range(H, 0, -1):
        if H % th:
            continue
        m_halo = (th + 2) * W
        m = th * W
        tile_bytes = (m_halo * Cin * 4                 # xb slice (f32)
                      + m_halo * Cmid * (4 + 2 + 2)    # t1 f32 + bf16 + padded copy
                      + m * 9 * Cmid * 2               # im2col (bf16)
                      + m * (Cmid + Cout) * 4          # t2 / t3 accumulators
                      + m * Cout * 4)                  # output tile
        if tile_bytes <= budget_bytes:
            return th
    return 1


def bottleneck_pallas(x_nchw, params, *, row_tile=None):
    """x_nchw: (N, Cin, H, W) float32. Returns (N, Cout, H, W) float32."""
    (w1, s1, b1, w2, s2, b2, w3, s3, b3) = params
    N, Cin, H, W = x_nchw.shape
    Cmid = w1.shape[1]
    Cout = w3.shape[1]
    assert Cout == Cin, "identity residual path requires inplanes == planes*4"

    if row_tile is None:
        row_tile = _pick_row_tile(H, W, Cin, Cmid, Cout)
    assert H % row_tile == 0
    TH = row_tile

    # TODO(synk): keep the surrounding graph in NHWC to drop these boundary transposes.
    x = jnp.transpose(x_nchw, (0, 2, 3, 1))                   # NHWC
    x_p = jnp.pad(x, ((0, 0), (1, 1), (0, 0), (0, 0)))        # zero halo rows for conv2

    # bf16 MXU operands (accumulation is f32 inside the kernel).
    w1b = w1.astype(jnp.bfloat16)                             # (Cin, Cmid)
    w2b = w2.reshape(9 * Cmid, Cmid).astype(jnp.bfloat16)     # (9*Cmid, Cmid)
    w3b = w3.astype(jnp.bfloat16)                             # (Cmid, Cout)

    s1r, b1r = s1.reshape(1, Cmid), b1.reshape(1, Cmid)
    s2r, b2r = s2.reshape(1, Cmid), b2.reshape(1, Cmid)
    s3r, b3r = s3.reshape(1, Cout), b3.reshape(1, Cout)

    flops = 2 * N * H * W * (Cin * Cmid + 9 * Cmid * Cmid + Cmid * Cout)
    bytes_accessed = (x_p.size * 4 + N * H * W * Cout * 4
                      + (w1b.size + w2b.size + w3b.size) * 2
                      + (4 * Cmid + 2 * Cout) * 4)

    out = pl.pallas_call(
        bottleneck_kernel,
        out_shape=jax.ShapeDtypeStruct((N, H, W, Cout), jnp.float32),
        grid_spec=pltpu.PrefetchScalarGridSpec(
            num_scalar_prefetch=0,
            grid=(N, H // TH),
            in_specs=[
                # Whole padded image per n: block index constant along the row-tile
                # axis, so the DMA happens once per n and the tile loop reuses it.
                pl.BlockSpec((1, H + 2, W, Cin), lambda n, i: (n, 0, 0, 0)),
                pl.BlockSpec((Cin, Cmid), lambda n, i: (0, 0)),
                pl.BlockSpec((1, Cmid), lambda n, i: (0, 0)),
                pl.BlockSpec((1, Cmid), lambda n, i: (0, 0)),
                pl.BlockSpec((9 * Cmid, Cmid), lambda n, i: (0, 0)),
                pl.BlockSpec((1, Cmid), lambda n, i: (0, 0)),
                pl.BlockSpec((1, Cmid), lambda n, i: (0, 0)),
                pl.BlockSpec((Cmid, Cout), lambda n, i: (0, 0)),
                pl.BlockSpec((1, Cout), lambda n, i: (0, 0)),
                pl.BlockSpec((1, Cout), lambda n, i: (0, 0)),
            ],
            out_specs=pl.BlockSpec((1, TH, W, Cout), lambda n, i: (n, i, 0, 0)),
        ),
        compiler_params=pltpu.CompilerParams(
            dimension_semantics=("parallel", "parallel"),
            vmem_limit_bytes=64 * 1024 * 1024),
        cost_estimate=pl.CostEstimate(flops=int(flops), transcendentals=0,
                                      bytes_accessed=int(bytes_accessed)),
    )(x_p, w1b, s1r, b1r, w2b, s2r, b2r, w3b, s3r, b3r)

    return jnp.transpose(out, (0, 3, 1, 2))                   # back to NCHW


# ------------------------- parameter construction -------------------------

def fold_bn(gamma, beta, mean, var, eps=1e-5):
    scale = gamma / jnp.sqrt(var + eps)
    bias = beta - mean * scale
    return scale, bias


def make_params(key, inplanes, planes):
    expansion = 4
    cout = planes * expansion
    keys = jax.random.split(key, 6)

    # Conv weights stored pre-transposed for matmul use:
    #   conv1: (Cin, Cmid), conv2: (3, 3, Cmid, Cmid) HWIO, conv3: (Cmid, Cout)
    w1 = 0.1 * jax.random.normal(keys[0], (inplanes, planes), jnp.float32)
    w2 = 0.1 * jax.random.normal(keys[1], (3, 3, planes, planes), jnp.float32)
    w3 = 0.1 * jax.random.normal(keys[2], (planes, cout), jnp.float32)

    def bn_params(k, c):
        k1, k2, k3 = jax.random.split(k, 3)
        gamma = 1.0 + 0.1 * jax.random.normal(k1, (c,), jnp.float32)
        beta = 0.1 * jax.random.normal(k2, (c,), jnp.float32)
        mean = 0.05 * jax.random.normal(k3, (c,), jnp.float32)
        var = jnp.linspace(0.5, 1.5, c, dtype=jnp.float32)
        return fold_bn(gamma, beta, mean, var)

    s1, b1 = bn_params(keys[3], planes)
    s2, b2 = bn_params(keys[4], planes)
    s3, b3 = bn_params(keys[5], cout)
    return (w1, s1, b1, w2, s2, b2, w3, s3, b3)


# ------------------------------ reference ---------------------------------

def bottleneck_ref(x_nchw, params, matmul_dtype=jnp.float32):
    (w1, s1, b1, w2, s2, b2, w3, s3, b3) = params
    x = jnp.transpose(x_nchw, (0, 2, 3, 1))  # NHWC
    dn = ("NHWC", "HWIO", "NHWC")

    def conv(v, w, pad="VALID"):
        return lax.conv_general_dilated(
            v.astype(matmul_dtype), w.astype(matmul_dtype), (1, 1), pad,
            dimension_numbers=dn, preferred_element_type=jnp.float32)

    t = conv(x, w1[None, None])                       # 1x1
    t = jnp.maximum(t * s1 + b1, 0.0)
    t = conv(t, w2, pad=((1, 1), (1, 1)))             # 3x3, pad 1
    t = jnp.maximum(t * s2 + b2, 0.0)
    t = conv(t, w3[None, None])                       # 1x1
    t = t * s3 + b3
    out = jnp.maximum(t + x, 0.0)
    return jnp.transpose(out, (0, 3, 1, 2))


if __name__ == "__main__":
    key = jax.random.PRNGKey(0)
    kx, kp = jax.random.split(key)

    # Bottleneck(inplanes=16, planes=4, stride=1, downsample=None)
    inplanes, planes = 16, 4
    N, H, W = 2, 16, 16

    x = jax.random.normal(kx, (N, inplanes, H, W), jnp.float32)  # NCHW like PyTorch
    params = make_params(kp, inplanes, planes)

    out = bottleneck_pallas(x, params)
    out = jax.block_until_ready(out)
    assert out.shape == (N, planes * 4, H, W)

    # Also exercise the multi-tile (halo) path to keep it covered at small cost.
    out_tiled = jax.block_until_ready(bottleneck_pallas(x, params, row_tile=8))
    assert jnp.allclose(out, out_tiled, atol=1e-5, rtol=1e-5), \
        "tiled path mismatch vs single-tile path"

    # Precision-matched reference (bf16 conv operands, f32 accumulation/elementwise).
    ref_bf16 = bottleneck_ref(x, params, matmul_dtype=jnp.bfloat16)
    assert jnp.allclose(out, ref_bf16, atol=2e-3, rtol=2e-3), \
        "mismatch vs bf16-matched reference"

    # Loose sanity check against the full-f32 reference (bounds MXU bf16 rounding).
    ref_f32 = bottleneck_ref(x, params, matmul_dtype=jnp.float32)
    assert jnp.allclose(out, ref_f32, atol=5e-2, rtol=5e-2), \
        "mismatch vs f32 reference"

    print("KERNEL_OK")
</pallas_src>

<mosaic_0001>
module attributes {stable_mosaic.version = 11 : i64} {
  func.func @bottleneck_kernel(%arg0: i32, %arg1: i32, %arg2: memref<1x18x16x16xf32, #tpu.memory_space<vmem>>, %arg3: memref<16x4xbf16, #tpu.memory_space<vmem>>, %arg4: memref<1x4xf32, #tpu.memory_space<vmem>>, %arg5: memref<1x4xf32, #tpu.memory_space<vmem>>, %arg6: memref<36x4xbf16, #tpu.memory_space<vmem>>, %arg7: memref<1x4xf32, #tpu.memory_space<vmem>>, %arg8: memref<1x4xf32, #tpu.memory_space<vmem>>, %arg9: memref<4x16xbf16, #tpu.memory_space<vmem>>, %arg10: memref<1x16xf32, #tpu.memory_space<vmem>>, %arg11: memref<1x16xf32, #tpu.memory_space<vmem>>, %arg12: memref<1x16x16x16xf32, #tpu.memory_space<vmem>>) attributes {dimension_semantics = [#tpu.dimension_semantics<parallel>, #tpu.dimension_semantics<parallel>], iteration_bounds = array<i64: 2, 1>, scalar_prefetch = 0 : i64, scratch_operands = 0 : i64, tpu.core_type = #tpu.core_type<tc>, window_params = [{transform_indices = @transform_0, window_bounds = array<i64: 1, 18, 16, 16>}, {pipeline_mode = #tpu.pipeline_mode<synchronous>, transform_indices = @transform_1, window_bounds = array<i64: 16, 4>}, {pipeline_mode = #tpu.pipeline_mode<synchronous>, transform_indices = @transform_2, window_bounds = array<i64: 1, 4>}, {pipeline_mode = #tpu.pipeline_mode<synchronous>, transform_indices = @transform_3, window_bounds = array<i64: 1, 4>}, {pipeline_mode = #tpu.pipeline_mode<synchronous>, transform_indices = @transform_4, window_bounds = array<i64: 36, 4>}, {pipeline_mode = #tpu.pipeline_mode<synchronous>, transform_indices = @transform_5, window_bounds = array<i64: 1, 4>}, {pipeline_mode = #tpu.pipeline_mode<synchronous>, transform_indices = @transform_6, window_bounds = array<i64: 1, 4>}, {pipeline_mode = #tpu.pipeline_mode<synchronous>, transform_indices = @transform_7, window_bounds = array<i64: 4, 16>}, {pipeline_mode = #tpu.pipeline_mode<synchronous>, transform_indices = @transform_8, window_bounds = array<i64: 1, 16>}, {pipeline_mode = #tpu.pipeline_mode<synchronous>, transform_indices = @transform_9, window_bounds = array<i64: 1, 16>}, {transform_indices = @transform_10, window_bounds = array<i64: 1, 16, 16, 16>}]} {
    %c16_i32 = arith.constant 16 : i32
    %0 = arith.muli %arg1, %c16_i32 : i32
    %1 = tpu.assume_multiple %0, 16 : i32
    %c0 = arith.constant 0 : index
    %2 = arith.index_cast %1 : i32 to index
    %c0_0 = arith.constant 0 : index
    %c0_1 = arith.constant 0 : index
    %3 = vector.load %arg2[%c0, %2, %c0_0, %c0_1] : memref<1x18x16x16xf32, #tpu.memory_space<vmem>>, vector<1x18x16x16xf32>
    %4 = vector.shape_cast %3 : vector<1x18x16x16xf32> to vector<18x16x16xf32>
    %5 = vector.shape_cast %4 : vector<18x16x16xf32> to vector<288x16xf32>
    %6 = arith.truncf %5 : vector<288x16xf32> to vector<288x16xbf16>
    %c0_2 = arith.constant 0 : index
    %c0_3 = arith.constant 0 : index
    %7 = vector.load %arg3[%c0_2, %c0_3] : memref<16x4xbf16, #tpu.memory_space<vmem>>, vector<16x4xbf16>
    %cst = arith.constant dense<0.000000e+00> : vector<288x4xf32>
    %8 = tpu.matmul %6, %7, %cst {dimension_numbers = #tpu.dot_dimension_numbers<[1], [0], [0], [1], [0, 0, 1, 1], [], []>} : vector<288x16xbf16>, vector<16x4xbf16>, vector<288x4xf32> -> vector<288x4xf32>
    %c0_4 = arith.constant 0 : index
    %c0_5 = arith.constant 0 : index
    %9 = vector.load %arg4[%c0_4, %c0_5] : memref<1x4xf32, #tpu.memory_space<vmem>>, vector<1x4xf32>
    %10 = vector.broadcast %9 : vector<1x4xf32> to vector<288x4xf32>
    %11 = arith.mulf %8, %10 : vector<288x4xf32>
    %c0_6 = arith.constant 0 : index
    %c0_7 = arith.constant 0 : index
    %12 = vector.load %arg5[%c0_6, %c0_7] : memref<1x4xf32, #tpu.memory_space<vmem>>, vector<1x4xf32>
    %13 = vector.broadcast %12 : vector<1x4xf32> to vector<288x4xf32>
    %14 = arith.addf %11, %13 : vector<288x4xf32>
    %cst_8 = arith.constant 0.000000e+00 : f32
    %15 = vector.broadcast %cst_8 : f32 to vector<288x4xf32>
    %16 = arith.maximumf %14, %15 : vector<288x4xf32>
    %17 = vector.shape_cast %16 : vector<288x4xf32> to vector<18x16x4xf32>
    %18 = tpu.iota {dimensions = array<i32: 0>} : vector<18x1x1xi32>
    %c0_i32 = arith.constant 0 : i32
    %19 = vector.broadcast %c0_i32 : i32 to vector<18x1x1xi32>
    %20 = arith.cmpi eq, %18, %19 : vector<18x1x1xi32>
    %c0_i32_9 = arith.constant 0 : i32
    %21 = arith.cmpi eq, %arg1, %c0_i32_9 : i32
    %22 = vector.broadcast %21 : i1 to vector<18x1x1xi1>
    %23 = arith.andi %20, %22 : vector<18x1x1xi1>
    %c17_i32 = arith.constant 17 : i32
    %24 = vector.broadcast %c17_i32 : i32 to vector<18x1x1xi32>
    %25 = arith.cmpi eq, %18, %24 : vector<18x1x1xi32>
    %c0_i32_10 = arith.constant 0 : i32
    %26 = arith.cmpi eq, %arg1, %c0_i32_10 : i32
    %27 = vector.broadcast %26 : i1 to vector<18x1x1xi1>
    %28 = arith.andi %25, %27 : vector<18x1x1xi1>
    %29 = arith.ori %23, %28 : vector<18x1x1xi1>
    %cst_11 = arith.constant 0.000000e+00 : f32
    %30 = vector.shape_cast %29 : vector<18x1x1xi1> to vector<18x1x1xi1>
    %31 = vector.broadcast %30 : vector<18x1x1xi1> to vector<18x16x4xi1>
    %32 = vector.broadcast %cst_11 : f32 to vector<18x16x4xf32>
    %33 = arith.select %31, %32, %17 : vector<18x16x4xi1>, vector<18x16x4xf32>
    %34 = arith.truncf %33 : vector<18x16x4xf32> to vector<18x16x4xbf16>
    %cst_12 = arith.constant 0.000000e+00 : bf16
    %35 = vector.broadcast %cst_12 : bf16 to vector<18x1x4xbf16>
    %36 = tpu.concatenate %35, %34, %35 in 1 : vector<18x1x4xbf16>, vector<18x16x4xbf16>, vector<18x1x4xbf16> -> vector<18x18x4xbf16>
    %37 = vector.extract_strided_slice %36 {offsets = [0, 0, 0], sizes = [18, 16, 4], strides = [1, 1, 1]} : vector<18x18x4xbf16> to vector<18x16x4xbf16>
    %38 = vector.extract_strided_slice %37 {offsets = [0, 0, 0], sizes = [16, 16, 4], strides = [1, 1, 1]} : vector<18x16x4xbf16> to vector<16x16x4xbf16>
    %39 = vector.extract_strided_slice %37 {offsets = [1, 0, 0], sizes = [16, 16, 4], strides = [1, 1, 1]} : vector<18x16x4xbf16> to vector<16x16x4xbf16>
    %40 = vector.extract_strided_slice %37 {offsets = [2, 0, 0], sizes = [16, 16, 4], strides = [1, 1, 1]} : vector<18x16x4xbf16> to vector<16x16x4xbf16>
    %41 = vector.extract_strided_slice %36 {offsets = [0, 1, 0], sizes = [18, 16, 4], strides = [1, 1, 1]} : vector<18x18x4xbf16> to vector<18x16x4xbf16>
    %42 = vector.extract_strided_slice %41 {offsets = [0, 0, 0], sizes = [16, 16, 4], strides = [1, 1, 1]} : vector<18x16x4xbf16> to vector<16x16x4xbf16>
    %43 = vector.extract_strided_slice %41 {offsets = [1, 0, 0], sizes = [16, 16, 4], strides = [1, 1, 1]} : vector<18x16x4xbf16> to vector<16x16x4xbf16>
    %44 = vector.extract_strided_slice %41 {offsets = [2, 0, 0], sizes = [16, 16, 4], strides = [1, 1, 1]} : vector<18x16x4xbf16> to vector<16x16x4xbf16>
    %45 = vector.extract_strided_slice %36 {offsets = [0, 2, 0], sizes = [18, 16, 4], strides = [1, 1, 1]} : vector<18x18x4xbf16> to vector<18x16x4xbf16>
    %46 = vector.extract_strided_slice %45 {offsets = [0, 0, 0], sizes = [16, 16, 4], strides = [1, 1, 1]} : vector<18x16x4xbf16> to vector<16x16x4xbf16>
    %47 = vector.extract_strided_slice %45 {offsets = [1, 0, 0], sizes = [16, 16, 4], strides = [1, 1, 1]} : vector<18x16x4xbf16> to vector<16x16x4xbf16>
    %48 = vector.extract_strided_slice %45 {offsets = [2, 0, 0], sizes = [16, 16, 4], strides = [1, 1, 1]} : vector<18x16x4xbf16> to vector<16x16x4xbf16>
    %49 = tpu.concatenate %38, %42, %46, %39, %43, %47, %40, %44, %48 in 2 : vector<16x16x4xbf16>, vector<16x16x4xbf16>, vector<16x16x4xbf16>, vector<16x16x4xbf16>, vector<16x16x4xbf16>, vector<16x16x4xbf16>, vector<16x16x4xbf16>, vector<16x16x4xbf16>, vector<16x16x4xbf16> -> vector<16x16x36xbf16>
    %50 = vector.shape_cast %49 : vector<16x16x36xbf16> to vector<256x36xbf16>
    %c0_13 = arith.constant 0 : index
    %c0_14 = arith.constant 0 : index
    %51 = vector.load %arg6[%c0_13, %c0_14] : memref<36x4xbf16, #tpu.memory_space<vmem>>, vector<36x4xbf16>
    %cst_15 = arith.constant dense<0.000000e+00> : vector<256x4xf32>
    %52 = tpu.matmul %50, %51, %cst_15 {dimension_numbers = #tpu.dot_dimension_numbers<[1], [0], [0], [1], [0, 0, 1, 1], [], []>} : vector<256x36xbf16>, vector<36x4xbf16>, vector<256x4xf32> -> vector<256x4xf32>
    %c0_16 = arith.constant 0 : index
    %c0_17 = arith.constant 0 : index
    %53 = vector.load %arg7[%c0_16, %c0_17] : memref<1x4xf32, #tpu.memory_space<vmem>>, vector<1x4xf32>
    %54 = vector.broadcast %53 : vector<1x4xf32> to vector<256x4xf32>
    %55 = arith.mulf %52, %54 : vector<256x4xf32>
    %c0_18 = arith.constant 0 : index
    %c0_19 = arith.constant 0 : index
    %56 = vector.load %arg8[%c0_18, %c0_19] : memref<1x4xf32, #tpu.memory_space<vmem>>, vector<1x4xf32>
    %57 = vector.broadcast %56 : vector<1x4xf32> to vector<256x4xf32>
    %58 = arith.addf %55, %57 : vector<256x4xf32>
    %cst_20 = arith.constant 0.000000e+00 : f32
    %59 = vector.broadcast %cst_20 : f32 to vector<256x4xf32>
    %60 = arith.maximumf %58, %59 : vector<256x4xf32>
    %61 = arith.truncf %60 : vector<256x4xf32> to vector<256x4xbf16>
    %c0_21 = arith.constant 0 : index
    %c0_22 = arith.constant 0 : index
    %62 = vector.load %arg9[%c0_21, %c0_22] : memref<4x16xbf16, #tpu.memory_space<vmem>>, vector<4x16xbf16>
    %cst_23 = arith.constant dense<0.000000e+00> : vector<256x16xf32>
    %63 = tpu.matmul %61, %62, %cst_23 {dimension_numbers = #tpu.dot_dimension_numbers<[1], [0], [0], [1], [0, 0, 1, 1], [], []>} : vector<256x4xbf16>, vector<4x16xbf16>, vector<256x16xf32> -> vector<256x16xf32>
    %c0_24 = arith.constant 0 : index
    %c0_25 = arith.constant 0 : index
    %64 = vector.load %arg10[%c0_24, %c0_25] : memref<1x16xf32, #tpu.memory_space<vmem>>, vector<1x16xf32>
    %65 = vector.broadcast %64 : vector<1x16xf32> to vector<256x16xf32>
    %66 = arith.mulf %63, %65 : vector<256x16xf32>
    %c0_26 = arith.constant 0 : index
    %c0_27 = arith.constant 0 : index
    %67 = vector.load %arg11[%c0_26, %c0_27] : memref<1x16xf32, #tpu.memory_space<vmem>>, vector<1x16xf32>
    %68 = vector.broadcast %67 : vector<1x16xf32> to vector<256x16xf32>
    %69 = arith.addf %66, %68 : vector<256x16xf32>
    %70 = vector.extract_strided_slice %4 {offsets = [1, 0, 0], sizes = [16, 16, 16], strides = [1, 1, 1]} : vector<18x16x16xf32> to vector<16x16x16xf32>
    %71 = vector.shape_cast %70 : vector<16x16x16xf32> to vector<256x16xf32>
    %72 = arith.addf %69, %71 : vector<256x16xf32>
    %cst_28 = arith.constant 0.000000e+00 : f32
    %73 = vector.broadcast %cst_28 : f32 to vector<256x16xf32>
    %74 = arith.maximumf %72, %73 : vector<256x16xf32>
    %75 = vector.shape_cast %74 : vector<256x16xf32> to vector<1x16x16x16xf32>
    %c0_29 = arith.constant 0 : index
    %c0_30 = arith.constant 0 : index
    %c0_31 = arith.constant 0 : index
    %c0_32 = arith.constant 0 : index
    %76 = vector.load %arg12[%c0_29, %c0_30, %c0_31, %c0_32] : memref<1x16x16x16xf32, #tpu.memory_space<vmem>>, vector<1x16x16x16xf32>
    tpu.vector_store %arg12[%c0_29, %c0_30, %c0_31, %c0_32], %75 {strides = array<i32>} : memref<1x16x16x16xf32, #tpu.memory_space<vmem>>, vector<1x16x16x16xf32>,
    return
  }
  func.func @transform_0(%arg0: i32, %arg1: i32) -> (i32, i32, i32, i32) {
    %c0_i32 = arith.constant 0 : i32
    %c0_i32_0 = arith.constant 0 : i32
    %c0_i32_1 = arith.constant 0 : i32
    %c0_i32_2 = arith.constant 0 : i32
    return %arg0, %c0_i32, %c0_i32_0, %c0_i32_1 : i32, i32, i32, i32
  }
  func.func @transform_1(%arg0: i32, %arg1: i32) -> (i32, i32) {
    %c0_i32 = arith.constant 0 : i32
    %c0_i32_0 = arith.constant 0 : i32
    %c0_i32_1 = arith.constant 0 : i32
    return %c0_i32, %c0_i32_0 : i32, i32
  }
  func.func @transform_2(%arg0: i32, %arg1: i32) -> (i32, i32) {
    %c0_i32 = arith.constant 0 : i32
    %c0_i32_0 = arith.constant 0 : i32
    %c0_i32_1 = arith.constant 0 : i32
    return %c0_i32, %c0_i32_0 : i32, i32
  }
  func.func @transform_3(%arg0: i32, %arg1: i32) -> (i32, i32) {
    %c0_i32 = arith.constant 0 : i32
    %c0_i32_0 = arith.constant 0 : i32
    %c0_i32_1 = arith.constant 0 : i32
    return %c0_i32, %c0_i32_0 : i32, i32
  }
  func.func @transform_4(%arg0: i32, %arg1: i32) -> (i32, i32) {
    %c0_i32 = arith.constant 0 : i32
    %c0_i32_0 = arith.constant 0 : i32
    %c0_i32_1 = arith.constant 0 : i32
    return %c0_i32, %c0_i32_0 : i32, i32
  }
  func.func @transform_5(%arg0: i32, %arg1: i32) -> (i32, i32) {
    %c0_i32 = arith.constant 0 : i32
    %c0_i32_0 = arith.constant 0 : i32
    %c0_i32_1 = arith.constant 0 : i32
    return %c0_i32, %c0_i32_0 : i32, i32
  }
  func.func @transform_6(%arg0: i32, %arg1: i32) -> (i32, i32) {
    %c0_i32 = arith.constant 0 : i32
    %c0_i32_0 = arith.constant 0 : i32
    %c0_i32_1 = arith.constant 0 : i32
    return %c0_i32, %c0_i32_0 : i32, i32
  }
  func.func @transform_7(%arg0: i32, %arg1: i32) -> (i32, i32) {
    %c0_i32 = arith.constant 0 : i32
    %c0_i32_0 = arith.constant 0 : i32
    %c0_i32_1 = arith.constant 0 : i32
    return %c0_i32, %c0_i32_0 : i32, i32
  }
  func.func @transform_8(%arg0: i32, %arg1: i32) -> (i32, i32) {
    %c0_i32 = arith.constant 0 : i32
    %c0_i32_0 = arith.constant 0 : i32
    %c0_i32_1 = arith.constant 0 : i32
    return %c0_i32, %c0_i32_0 : i32, i32
  }
  func.func @transform_9(%arg0: i32, %arg1: i32) -> (i32, i32) {
    %c0_i32 = arith.constant 0 : i32
    %c0_i32_0 = arith.constant 0 : i32
    %c0_i32_1 = arith.constant 0 : i32
    return %c0_i32, %c0_i32_0 : i32, i32
  }
  func.func @transform_10(%arg0: i32, %arg1: i32) -> (i32, i32, i32, i32) {
    %c0_i32 = arith.constant 0 : i32
    %c0_i32_0 = arith.constant 0 : i32
    %c0_i32_1 = arith.constant 0 : i32
    return %arg0, %arg1, %c0_i32, %c0_i32_0 : i32, i32, i32, i32
  }
}

</mosaic_0001>

<llo_original>
// kernel: tpu_custom_call.1
$region0: #{tpu_custom_call.1}
  #allocation0 [shape = 'u32[]', space=smem, size = 0x4, offset = 0x4, fixed_abs, tag = 'smem constant byte address 0x4 - core index']
  #allocation1 [shape = 'u32[144,128]{1,0:T(1,128)}', space=vmem, size = 0x12000, scoped, tag = 'internal scratch']
  %s0 = inlined_call_operand.vmem [shape: f32[2,18,16,16], index: 0, kind: input, shape index: {}]
  %s1 = inlined_call_operand.vmem [shape: bf16[16,4], index: 1, kind: input, shape index: {}]
  %s2 = inlined_call_operand.vmem [shape: f32[1,4], index: 2, kind: input, shape index: {}]
  %s3 = inlined_call_operand.vmem [shape: f32[1,4], index: 3, kind: input, shape index: {}]
  %s4 = inlined_call_operand.vmem [shape: bf16[36,4], index: 4, kind: input, shape index: {}]
  %s5 = inlined_call_operand.vmem [shape: f32[1,4], index: 5, kind: input, shape index: {}]
  %s6 = inlined_call_operand.vmem [shape: f32[1,4], index: 6, kind: input, shape index: {}]
  %s7 = inlined_call_operand.vmem [shape: bf16[4,16], index: 7, kind: input, shape index: {}]
  %s8 = inlined_call_operand.vmem [shape: f32[1,16], index: 8, kind: input, shape index: {}]
  %s9 = inlined_call_operand.vmem [shape: f32[1,16], index: 9, kind: input, shape index: {}]
  %s10 = inlined_call_operand.hbm [shape: f32[2,16,16,16], index: 10, kind: output, shape index: {}]
  %s11 = sld [smem:[#allocation0]]
  $region73: #{tpu_custom_call.1} parent=0
    _
  %s13 = ssub.s32 1, %s11
  %s14 = scalar_select 0, %s13, %s11
  $region1: #{tpu_custom_call.1} parent=0
    #allocation2 [shape = 'u8[262144]{0}', space=vmem, size = 0x40000, scoped, tag = 'output window, operand 0']
    #allocation3 [shape = 's32[2]{0}', space=sflag, size = 0x8, scoped, tag = 'scoped memory for tpu_custom_call.1']
    %15 = vsyncpa [#allocation3], 0
    %s16 = scalar_lea.sflag [#allocation3], 1
    %17 = vsyncpa %s16, 0
    loop: start=0, step=1, limit=4
    $region2: #{tpu_custom_call.1} parent=1 // loop_pre_header
      _
    $region3: #{tpu_custom_call.1} parent=1 // loop_header
      %s19 = sphi 0, %s23
      %p20 = scmp.ge.s32.totalorder %s19, 4
      %s26 = sphi 0, %s38
      %s27 = sphi 0, %s34
      %s28 = sphi 0, %s26
      %s29 = sphi 0, %s27
      %s30 = sphi 0, %s28
      %s31 = sphi 0, %s29
      %s41 = sphi 0, %s43
      %s44 = sphi 0, %s41
      %s45 = sphi 0, %s44
      %s61 = sphi 0, %s45
      %s65 = sphi 0, %s65
      %s67 = sphi 0, %s65
      %s68 = sphi 0, %s67
      %s82 = sphi 0, %s68
      %s86 = sphi 0, %s86
      %s88 = sphi 0, %s86
      %s89 = sphi 0, %s88
      %s103 = sphi 0, %s89
      %s107 = sphi 0, %s107
      %s109 = sphi 0, %s107
      %s110 = sphi 0, %s109
      %s124 = sphi 0, %s110
      %s128 = sphi 0, %s128
      %s130 = sphi 0, %s128
      %s131 = sphi 0, %s130
      %s145 = sphi 0, %s131
      %s149 = sphi 0, %s149
      %s151 = sphi 0, %s149
      %s152 = sphi 0, %s151
      %s166 = sphi 0, %s152
      %s170 = sphi 0, %s170
      %s172 = sphi 0, %s170
      %s173 = sphi 0, %s172
      %s187 = sphi 0, %s173
      %s191 = sphi 0, %s191
      %s193 = sphi 0, %s191
      %s194 = sphi 0, %s193
      %s208 = sphi 0, %s194
      %s212 = sphi 0, %s212
      %s214 = sphi 0, %s212
      %s215 = sphi 0, %s214
      %s229 = sphi 0, %s215
      %s233 = sphi 0, %s233
      %s235 = sphi 0, %s233
      %s236 = sphi 0, %s235
      %s250 = sphi 0, %s236
      %s258 = sphi 0, %s260
      %s261 = sphi 0, %s258
      %s262 = sphi 0, %s261
      %s278 = sphi 0, %s262
    $region4: #{tpu_custom_call.1} parent=1 // loop_header_branch
      %22 = sbr.rel (%p20) target = $region8
    $region5: #{tpu_custom_call.1} parent=1 // loop_body
      %s24 = ssub.s32 %s19, 1
      %s25 = ssub.s32 %s19, 2
      %s32 = sadd.s32 1, %s27
      %p33 = scmp.ge.s32.totalorder %s32, 1
      %s34 = scalar_select %p33, 0, %s32
      %s35 = sadd.s32 1, %s26
      %s36 = scalar_select %p33, %s35, %s26
      %p37 = scmp.ge.s32.totalorder %s36, 2
      %s38 = scalar_select %p37, 0, %s36
      %s39 = ssub.s32 %s26, %s38
      %p40 = scmp.eq.s32.totalorder %s39, 0
      %s42 = sadd.s32 %s41, 1
      %s43 = scalar_select %p40, %s41, %s42
      %p46 = pneg %p40
      %p47 = scmp.eq.s32.totalorder %s19, 1
      %p48 = por %p46, %p47
      %p49 = scmp.ne.s32.totalorder %s41, %s44
      %p50 = scmp.eq.s32.totalorder %s19, 0
      %p51 = por %p49, %p50
      %p52 = scmp.ne.s32.totalorder %s41, %s44
      %p53 = scmp.eq.s32.totalorder %s24, 1
      %p54 = por %p52, %p53
      %p55 = scmp.ne.s32.totalorder %s44, %s45
      %p56 = scmp.eq.s32.totalorder %s24, 0
      %p57 = por %p55, %p56
      %p58 = scmp.ne.s32.totalorder %s44, %s45
      %p59 = scmp.eq.s32.totalorder %s25, 1
      %p60 = por %p58, %p59
      %p62 = scmp.ne.s32.totalorder %s45, %s61
      %p63 = scmp.eq.s32.totalorder %s25, 0
      %p64 = por %p62, %p63
      %s66 = sadd.s32 %s65, 1
      %p69 = scmp.eq.s32.totalorder %s19, 1
      %p70 = scmp.ne.s32.totalorder %s65, %s67
      %p71 = scmp.eq.s32.totalorder %s19, 0
      %p72 = por %p70, %p71
      %p73 = scmp.ne.s32.totalorder %s65, %s67
      %p74 = scmp.eq.s32.totalorder %s24, 1
      %p75 = por %p73, %p74
      %p76 = scmp.ne.s32.totalorder %s67, %s68
      %p77 = scmp.eq.s32.totalorder %s24, 0
      %p78 = por %p76, %p77
      %p79 = scmp.ne.s32.totalorder %s67, %s68
      %p80 = scmp.eq.s32.totalorder %s25, 1
      %p81 = por %p79, %p80
      %p83 = scmp.ne.s32.totalorder %s68, %s82
      %p84 = scmp.eq.s32.totalorder %s25, 0
      %p85 = por %p83, %p84
      %s87 = sadd.s32 %s86, 1
      %p90 = scmp.eq.s32.totalorder %s19, 1
      %p91 = scmp.ne.s32.totalorder %s86, %s88
      %p92 = scmp.eq.s32.totalorder %s19, 0
      %p93 = por %p91, %p92
      %p94 = scmp.ne.s32.totalorder %s86, %s88
      %p95 = scmp.eq.s32.totalorder %s24, 1
      %p96 = por %p94, %p95
      %p97 = scmp.ne.s32.totalorder %s88, %s89
      %p98 = scmp.eq.s32.totalorder %s24, 0
      %p99 = por %p97, %p98
      %p100 = scmp.ne.s32.totalorder %s88, %s89
      %p101 = scmp.eq.s32.totalorder %s25, 1
      %p102 = por %p100, %p101
      %p104 = scmp.ne.s32.totalorder %s89, %s103
      %p105 = scmp.eq.s32.totalorder %s25, 0
      %p106 = por %p104, %p105
      %s108 = sadd.s32 %s107, 1
      %p111 = scmp.eq.s32.totalorder %s19, 1
      %p112 = scmp.ne.s32.totalorder %s107, %s109
      %p113 = scmp.eq.s32.totalorder %s19, 0
      %p114 = por %p112, %p113
      %p115 = scmp.ne.s32.totalorder %s107, %s109
      %p116 = scmp.eq.s32.totalorder %s24, 1
      %p117 = por %p115, %p116
      %p118 = scmp.ne.s32.totalorder %s109, %s110
      %p119 = scmp.eq.s32.totalorder %s24, 0
      %p120 = por %p118, %p119
      %p121 = scmp.ne.s32.totalorder %s109, %s110
      %p122 = scmp.eq.s32.totalorder %s25, 1
      %p123 = por %p121, %p122
      %p125 = scmp.ne.s32.totalorder %s110, %s124
      %p126 = scmp.eq.s32.totalorder %s25, 0
      %p127 = por %p125, %p126
      %s129 = sadd.s32 %s128, 1
      %p132 = scmp.eq.s32.totalorder %s19, 1
      %p133 = scmp.ne.s32.totalorder %s128, %s130
      %p134 = scmp.eq.s32.totalorder %s19, 0
      %p135 = por %p133, %p134
      %p136 = scmp.ne.s32.totalorder %s128, %s130
      %p137 = scmp.eq.s32.totalorder %s24, 1
      %p138 = por %p136, %p137
      %p139 = scmp.ne.s32.totalorder %s130, %s131
      %p140 = scmp.eq.s32.totalorder %s24, 0
      %p141 = por %p139, %p140
      %p142 = scmp.ne.s32.totalorder %s130, %s131
      %p143 = scmp.eq.s32.totalorder %s25, 1
      %p144 = por %p142, %p143
      %p146 = scmp.ne.s32.totalorder %s131, %s145
      %p147 = scmp.eq.s32.totalorder %s25, 0
      %p148 = por %p146, %p147
      %s150 = sadd.s32 %s149, 1
      %p153 = scmp.eq.s32.totalorder %s19, 1
      %p154 = scmp.ne.s32.totalorder %s149, %s151
      %p155 = scmp.eq.s32.totalorder %s19, 0
      %p156 = por %p154, %p155
      %p157 = scmp.ne.s32.totalorder %s149, %s151
      %p158 = scmp.eq.s32.totalorder %s24, 1
      %p159 = por %p157, %p158
      %p160 = scmp.ne.s32.totalorder %s151, %s152
      %p161 = scmp.eq.s32.totalorder %s24, 0
      %p162 = por %p160, %p161
      %p163 = scmp.ne.s32.totalorder %s151, %s152
      %p164 = scmp.eq.s32.totalorder %s25, 1
      %p165 = por %p163, %p164
      %p167 = scmp.ne.s32.totalorder %s152, %s166
      %p168 = scmp.eq.s32.totalorder %s25, 0
      %p169 = por %p167, %p168
      %s171 = sadd.s32 %s170, 1
      %p174 = scmp.eq.s32.totalorder %s19, 1
      %p175 = scmp.ne.s32.totalorder %s170, %s172
      %p176 = scmp.eq.s32.totalorder %s19, 0
      %p177 = por %p175, %p176
      %p178 = scmp.ne.s32.totalorder %s170, %s172
      %p179 = scmp.eq.s32.totalorder %s24, 1
      %p180 = por %p178, %p179
      %p181 = scmp.ne.s32.totalorder %s172, %s173
      %p182 = scmp.eq.s32.totalorder %s24, 0
      %p183 = por %p181, %p182
      %p184 = scmp.ne.s32.totalorder %s172, %s173
      %p185 = scmp.eq.s32.totalorder %s25, 1
      %p186 = por %p184, %p185
      %p188 = scmp.ne.s32.totalorder %s173, %s187
      %p189 = scmp.eq.s32.totalorder %s25, 0
      %p190 = por %p188, %p189
      %s192 = sadd.s32 %s191, 1
      %p195 = scmp.eq.s32.totalorder %s19, 1
      %p196 = scmp.ne.s32.totalorder %s191, %s193
      %p197 = scmp.eq.s32.totalorder %s19, 0
      %p198 = por %p196, %p197
      %p199 = scmp.ne.s32.totalorder %s191, %s193
      %p200 = scmp.eq.s32.totalorder %s24, 1
      %p201 = por %p199, %p200
      %p202 = scmp.ne.s32.totalorder %s193, %s194
      %p203 = scmp.eq.s32.totalorder %s24, 0
      %p204 = por %p202, %p203
      %p205 = scmp.ne.s32.totalorder %s193, %s194
      %p206 = scmp.eq.s32.totalorder %s25, 1
      %p207 = por %p205, %p206
      %p209 = scmp.ne.s32.totalorder %s194, %s208
      %p210 = scmp.eq.s32.totalorder %s25, 0
      %p211 = por %p209, %p210
      %s213 = sadd.s32 %s212, 1
      %p216 = scmp.eq.s32.totalorder %s19, 1
      %p217 = scmp.ne.s32.totalorder %s212, %s214
      %p218 = scmp.eq.s32.totalorder %s19, 0
      %p219 = por %p217, %p218
      %p220 = scmp.ne.s32.totalorder %s212, %s214
      %p221 = scmp.eq.s32.totalorder %s24, 1
      %p222 = por %p220, %p221
      %p223 = scmp.ne.s32.totalorder %s214, %s215
      %p224 = scmp.eq.s32.totalorder %s24, 0
      %p225 = por %p223, %p224
      %p226 = scmp.ne.s32.totalorder %s214, %s215
      %p227 = scmp.eq.s32.totalorder %s25, 1
      %p228 = por %p226, %p227
      %p230 = scmp.ne.s32.totalorder %s215, %s229
      %p231 = scmp.eq.s32.totalorder %s25, 0
      %p232 = por %p230, %p231
      %s234 = sadd.s32 %s233, 1
      %p237 = scmp.eq.s32.totalorder %s19, 1
      %p238 = scmp.ne.s32.totalorder %s233, %s235
      %p239 = scmp.eq.s32.totalorder %s19, 0
      %p240 = por %p238, %p239
      %p241 = scmp.ne.s32.totalorder %s233, %s235
      %p242 = scmp.eq.s32.totalorder %s24, 1
      %p243 = por %p241, %p242
      %p244 = scmp.ne.s32.totalorder %s235, %s236
      %p245 = scmp.eq.s32.totalorder %s24, 0
      %p246 = por %p244, %p245
      %p247 = scmp.ne.s32.totalorder %s235, %s236
      %p248 = scmp.eq.s32.totalorder %s25, 1
      %p249 = por %p247, %p248
      %p251 = scmp.ne.s32.totalorder %s236, %s250
      %p252 = scmp.eq.s32.totalorder %s25, 0
      %p253 = por %p251, %p252
      %s254 = ssub.s32 %s26, %s38
      %s255 = ssub.s32 %s27, %s34
      %s256 = sor.u32 %s254, %s255
      %p257 = scmp.eq.s32.totalorder %s256, 0
      %s259 = sadd.s32 %s258, 1
      %s260 = scalar_select %p257, %s258, %s259
      %p263 = pneg %p257
      %p264 = scmp.eq.s32.totalorder %s19, 1
      %p265 = por %p263, %p264
      %p266 = scmp.ne.s32.totalorder %s258, %s261
      %p267 = scmp.eq.s32.totalorder %s19, 0
      %p268 = por %p266, %p267
      %p269 = scmp.ne.s32.totalorder %s258, %s261
      %p270 = scmp.eq.s32.totalorder %s24, 1
      %p271 = por %p269, %p270
      %p272 = scmp.ne.s32.totalorder %s261, %s262
      %p273 = scmp.eq.s32.totalorder %s24, 0
      %p274 = por %p272, %p273
      %p275 = scmp.ne.s32.totalorder %s261, %s262
      %p276 = scmp.eq.s32.totalorder %s25, 1
      %p277 = por %p275, %p276
      %p279 = scmp.ne.s32.totalorder %s262, %s278
      %p280 = scmp.eq.s32.totalorder %s25, 0
      %p281 = por %p279, %p280
      %p282 = scmp.le.s32.totalorder 1, %s19
      %p283 = scmp.lt.s32.totalorder %s19, 3
      %p284 = pnand %p282, %p283
      %p285 = pneg %p284
      // Predicated region
      $region9: #{tpu_custom_call.1} parent=5 // pred_check
        _
      $region10: #{tpu_custom_call.1} parent=5 // pred_check_branch
        %287 = sbr.rel (%p284) target = $region12
      $region11: #{tpu_custom_call.1} parent=5 // pred_region
        %s288 = ssub.s32 %s19, 1
        // Predicated region
        $region13: #{tpu_custom_call.1} parent=11 // pred_check
          %p289 = pneg %p78
        $region14: #{tpu_custom_call.1} parent=11 // pred_check_branch
          %291 = sbr.rel (%p289) target = $region16
        $region15: #{tpu_custom_call.1} parent=11 // pred_region
          _
        $region16: #{tpu_custom_call.1} parent=11 // pred_fallthru
          _
        // Predicated region
        $region17: #{tpu_custom_call.1} parent=11 // pred_check
          %p292 = pneg %p99
        $region18: #{tpu_custom_call.1} parent=11 // pred_check_branch
          %294 = sbr.rel (%p292) target = $region20
        $region19: #{tpu_custom_call.1} parent=11 // pred_region
          _
        $region20: #{tpu_custom_call.1} parent=11 // pred_fallthru
          _
        // Predicated region
        $region21: #{tpu_custom_call.1} parent=11 // pred_check
          %p295 = pneg %p120
        $region22: #{tpu_custom_call.1} parent=11 // pred_check_branch
          %297 = sbr.rel (%p295) target = $region24
        $region23: #{tpu_custom_call.1} parent=11 // pred_region
          _
        $region24: #{tpu_custom_call.1} parent=11 // pred_fallthru
          _
        // Predicated region
        $region25: #{tpu_custom_call.1} parent=11 // pred_check
          %p298 = pneg %p141
        $region26: #{tpu_custom_call.1} parent=11 // pred_check_branch
          %300 = sbr.rel (%p298) target = $region28
        $region27: #{tpu_custom_call.1} parent=11 // pred_region
          _
        $region28: #{tpu_custom_call.1} parent=11 // pred_fallthru
          _
        // Predicated region
        $region29: #{tpu_custom_call.1} parent=11 // pred_check
          %p301 = pneg %p162
        $region30: #{tpu_custom_call.1} parent=11 // pred_check_branch
          %303 = sbr.rel (%p301) target = $region32
        $region31: #{tpu_custom_call.1} parent=11 // pred_region
          _
        $region32: #{tpu_custom_call.1} parent=11 // pred_fallthru
          _
        // Predicated region
        $region33: #{tpu_custom_call.1} parent=11 // pred_check
          %p304 = pneg %p183
        $region34: #{tpu_custom_call.1} parent=11 // pred_check_branch
          %306 = sbr.rel (%p304) target = $region36
        $region35: #{tpu_custom_call.1} parent=11 // pred_region
          _
        $region36: #{tpu_custom_call.1} parent=11 // pred_fallthru
          _
        // Predicated region
        $region37: #{tpu_custom_call.1} parent=11 // pred_check
          %p307 = pneg %p204
        $region38: #{tpu_custom_call.1} parent=11 // pred_check_branch
          %309 = sbr.rel (%p307) target = $region40
        $region39: #{tpu_custom_call.1} parent=11 // pred_region
          _
        $region40: #{tpu_custom_call.1} parent=11 // pred_fallthru
          _
        // Predicated region
        $region41: #{tpu_custom_call.1} parent=11 // pred_check
          %p310 = pneg %p225
        $region42: #{tpu_custom_call.1} parent=11 // pred_check_branch
          %312 = sbr.rel (%p310) target = $region44
        $region43: #{tpu_custom_call.1} parent=11 // pred_region
          _
        $region44: #{tpu_custom_call.1} parent=11 // pred_fallthru
          _
        // Predicated region
        $region45: #{tpu_custom_call.1} parent=11 // pred_check
          %p313 = pneg %p246
        $region46: #{tpu_custom_call.1} parent=11 // pred_check_branch
          %315 = sbr.rel (%p313) target = $region48
        $region47: #{tpu_custom_call.1} parent=11 // pred_region
          _
        $region48: #{tpu_custom_call.1} parent=11 // pred_fallthru
          _
      $region12: #{tpu_custom_call.1} parent=5 // pred_fallthru
        _
      %p316 = scmp.lt.s32.totalorder %s19, 2
      // Predicated region
      $region49: #{tpu_custom_call.1} parent=5 // pred_check
        %p317 = pneg %p316
      $region50: #{tpu_custom_call.1} parent=5 // pred_check_branch
        %319 = sbr.rel (%p317) target = $region52
      $region51: #{tpu_custom_call.1} parent=5 // pred_region
        // Predicated region
        $region53: #{tpu_custom_call.1} parent=51 // pred_check
          %p320 = pneg %p51
        $region54: #{tpu_custom_call.1} parent=51 // pred_check_branch
          %322 = sbr.rel (%p320) target = $region56
        $region55: #{tpu_custom_call.1} parent=51 // pred_region
          %p323 = scmp.lt.s32.totalorder %s26, 1
          %s324 = scalar_select %p323, %s26, 1
          %s325 = smul.addr %s324, 36
          %s326 = smul.addr %s325, 8
          %s327 = scalar_lea.vmem %s0, %s326
        $region56: #{tpu_custom_call.1} parent=51 // pred_fallthru
          _
      $region52: #{tpu_custom_call.1} parent=5 // pred_fallthru
        _
      %p328 = scmp.le.s32.totalorder 1, %s19
      %p329 = scmp.lt.s32.totalorder %s19, 3
      %p330 = pnand %p328, %p329
      %p331 = pneg %p330
      // Predicated region
      $region57: #{tpu_custom_call.1} parent=5 // pred_check
        _
      $region58: #{tpu_custom_call.1} parent=5 // pred_check_branch
        %333 = sbr.rel (%p330) target = $region60
      $region59: #{tpu_custom_call.1} parent=5 // pred_region
        %s334 = ssub.s32 %s19, 1
        %p335 = scmp.lt.s32.totalorder %s28, 1
        %s336 = scalar_select %p335, %s28, 1
        %s337 = smul.addr %s336, 36
        %s338 = smul.addr %s337, 8
        %s339 = scalar_lea.vmem %s0, %s338
        %p340 = pneg %p57
        %p341 = pneg %p54
        %p342 = pneg %p78
        %p343 = pneg %p75
        %p344 = pneg %p99
        %p345 = pneg %p96
        %p346 = pneg %p120
        %p347 = pneg %p117
        %p348 = pneg %p141
        %p349 = pneg %p138
        %p350 = pneg %p162
        %p351 = pneg %p159
        %p352 = pneg %p183
        %p353 = pneg %p180
        %p354 = pneg %p204
        %p355 = pneg %p201
        %p356 = pneg %p225
        %p357 = pneg %p222
        %p358 = pneg %p246
        %p359 = pneg %p243
        %p360 = pneg %p274
        %p361 = pneg %p271
        %s362 = sand.u32 %s261, 1
        %s363 = scalar_lea.sflag [#allocation3], %s362
        %s364 = sand.u32 %s261, 1
        %s365 = smul.addr %s364, 256
        %s366 = scalar_lea.vmem [#allocation2], %s365
        %p367 = scmp.lt.s32.totalorder %s28, 1
        %s368 = scalar_select %p367, %s28, 1
        %s369 = smul.addr %s368, 36
        %s370 = smul.addr %s369, 8
        %s371 = scalar_lea.vmem %s0, %s370
        %s372 = smul.u32 16, %s29
        %s374 = smul.u32 %s29, 16
        %s375 = smul.u32 %s374, 16
        %s376 = scalar_lea.vmem %s371, %s375
        %v377 = vld [vmem:[%s376] sm:$0xff]
        %v378 = vld [vmem:[%s376 + $0x8] sm:$0xff]
        %v379 = vld [vmem:[%s376 + $0x10] sm:$0xff]
        %v380 = vld [vmem:[%s376 + $0x18] sm:$0xff]
        %v381 = vld [vmem:[%s376 + $0x20] sm:$0xff]
        %v382 = vld [vmem:[%s376 + $0x28] sm:$0xff]
        %v383 = vld [vmem:[%s376 + $0x30] sm:$0xff]
        %v384 = vld [vmem:[%s376 + $0x38] sm:$0xff]
        %v385 = vld [vmem:[%s376 + $0x40] sm:$0xff]
        %v386 = vld [vmem:[%s376 + $0x48] sm:$0xff]
        %v387 = vld [vmem:[%s376 + $0x50] sm:$0xff]
        %v388 = vld [vmem:[%s376 + $0x58] sm:$0xff]
        %v389 = vld [vmem:[%s376 + $0x60] sm:$0xff]
        %v390 = vld [vmem:[%s376 + $0x68] sm:$0xff]
        %v391 = vld [vmem:[%s376 + $0x70] sm:$0xff]
        %v392 = vld [vmem:[%s376 + $0x78] sm:$0xff]
        %v393 = vld [vmem:[%s376 + $0x80] sm:$0xff]
        %v394 = vld [vmem:[%s376 + $0x88] sm:$0xff]
        %v395 = vld [vmem:[%s376 + $0x90] sm:$0xff]
        %v396 = vld [vmem:[%s376 + $0x98] sm:$0xff]
        %v397 = vld [vmem:[%s376 + $0xa0] sm:$0xff]
        %v398 = vld [vmem:[%s376 + $0xa8] sm:$0xff]
        %v399 = vld [vmem:[%s376 + $0xb0] sm:$0xff]
        %v400 = vld [vmem:[%s376 + $0xb8] sm:$0xff]
        %v401 = vld [vmem:[%s376 + $0xc0] sm:$0xff]
        %v402 = vld [vmem:[%s376 + $0xc8] sm:$0xff]
        %v403 = vld [vmem:[%s376 + $0xd0] sm:$0xff]
        %v404 = vld [vmem:[%s376 + $0xd8] sm:$0xff]
        %v405 = vld [vmem:[%s376 + $0xe0] sm:$0xff]
        %v406 = vld [vmem:[%s376 + $0xe8] sm:$0xff]
        %v407 = vld [vmem:[%s376 + $0xf0] sm:$0xff]
        %v408 = vld [vmem:[%s376 + $0xf8] sm:$0xff]
        %v409 = vld [vmem:[%s376 + $0x100] sm:$0xff]
        %v410 = vld [vmem:[%s376 + $0x108] sm:$0xff]
        %v411 = vld [vmem:[%s376 + $0x110] sm:$0xff]
        %v412 = vld [vmem:[%s376 + $0x118] sm:$0xff]
        %v413 = vpack.c.bf16 %v378, %v377
        %v414 = vpack.c.bf16 %v380, %v379
        %v415 = vpack.c.bf16 %v382, %v381
        %v416 = vpack.c.bf16 %v384, %v383
        %v417 = vpack.c.bf16 %v386, %v385
        %v418 = vpack.c.bf16 %v388, %v387
        %v419 = vpack.c.bf16 %v390, %v389
        %v420 = vpack.c.bf16 %v392, %v391
        %v421 = vpack.c.bf16 %v394, %v393
        %v422 = vpack.c.bf16 %v396, %v395
        %v423 = vpack.c.bf16 %v398, %v397
        %v424 = vpack.c.bf16 %v400, %v399
        %v425 = vpack.c.bf16 %v402, %v401
        %v426 = vpack.c.bf16 %v404, %v403
        %v427 = vpack.c.bf16 %v406, %v405
        %v428 = vpack.c.bf16 %v408, %v407
        %v429 = vpack.c.bf16 %v410, %v409
        %v430 = vpack.c.bf16 %v412, %v411
        %v431 = vld [vmem:[%s1] sm:$0xf]
        %v432 = vld [vmem:[%s1 + $0x4] sm:$0xf]
        %v435 = vunpack.c.l.b16 %v431
        %v436 = vunpack.c.l.b16 %v432
        %v437 = vpack.c.b16 %v436, %v435
        %vm439 = vcmask 130048
        %v441 = vsel %vm439, %v413, 0
        %v444 = vsel %vm439, %v414, 0
        %v447 = vsel %vm439, %v415, 0
        %v450 = vsel %vm439, %v416, 0
        %v453 = vsel %vm439, %v417, 0
        %v456 = vsel %vm439, %v418, 0
        %v459 = vsel %vm439, %v419, 0
        %v462 = vsel %vm439, %v420, 0
        %v465 = vsel %vm439, %v421, 0
        %v468 = vsel %vm439, %v422, 0
        %v471 = vsel %vm439, %v423, 0
        %v474 = vsel %vm439, %v424, 0
        %v477 = vsel %vm439, %v425, 0
        %v480 = vsel %vm439, %v426, 0
        %v483 = vsel %vm439, %v427, 0
        %v486 = vsel %vm439, %v428, 0
        %v489 = vsel %vm439, %v429, 0
        %v492 = vsel %vm439, %v430, 0
        %494 = vmatprep.subr.bf16.mxu0 0
        %495 = vmatpush1.bf16.msra.mxu0 0
        %496 = vmatprep.subr.bf16.mxu0 0
        %497 = vmatpush1.bf16.msra.mxu0 0
        %498 = vmatprep.subr.bf16.mxu0 0
        %499 = vmatpush1.bf16.msra.mxu0 0
        %500 = vmatprep.subr.bf16.mxu0 0
        %501 = vmatpush1.bf16.msra.mxu0 0
        %502 = vmatprep.subr.bf16.mxu0 0
        %503 = vmatpush1.bf16.msra.mxu0 0
        %504 = vmatprep.subr.bf16.mxu0 0
        %505 = vmatpush1.bf16.msra.mxu0 0
        %506 = vmatprep.subr.bf16.mxu0 0
        %507 = vmatpush1.bf16.msra.mxu0 0
        %508 = vmatprep.subr.bf16.mxu0 0
        %509 = vmatpush1.bf16.msra.mxu0 %v437
        %510 = vmatprep.subr.bf16.mxu0 0
        %511 = vmatpush2.bf16.msra.mxu0 0
        %512 = vmatprep.subr.bf16.mxu0 0
        %513 = vmatpush2.bf16.msra.mxu0 0
        %514 = vmatprep.subr.bf16.mxu0 0
        %515 = vmatpush2.bf16.msra.mxu0 0
        %516 = vmatprep.subr.bf16.mxu0 0
        %517 = vmatpush2.bf16.msra.mxu0 0
        %518 = vmatprep.subr.bf16.mxu0 0
        %519 = vmatpush2.bf16.msra.mxu0 0
        %520 = vmatprep.subr.bf16.mxu0 0
        %521 = vmatpush2.bf16.msra.mxu0 0
        %522 = vmatprep.subr.bf16.mxu0 0
        %523 = vmatpush2.bf16.msra.mxu0 0
        %524 = vmatprep.subr.bf16.mxu0 0
        %525 = vmatpush2.bf16.msra.mxu0 0
        %526 = vmatprep.mubr.bf16.mxu0 0
        %527 = vmatmul.mubr.bf16.gmra.mxu0 %v441
        %v528 = vpop.f32.mrf.mxu0
        %v529 = vadd.f32 0.0, %v528
        %v530 = vpop.f32.mrf.mxu0
        %v531 = vpop.f32.mrf.mxu0
        %v532 = vadd.f32 0.0, %v531
        %v533 = vpop.f32.mrf.mxu0
        %534 = vmatprep.mubr.bf16.mxu0 0
        %535 = vmatmul.mubr.bf16.gmra.mxu0 %v444
        %v536 = vpop.f32.mrf.mxu0
        %v537 = vadd.f32 0.0, %v536
        %v538 = vpop.f32.mrf.mxu0
        %v539 = vpop.f32.mrf.mxu0
        %v540 = vadd.f32 0.0, %v539
        %v541 = vpop.f32.mrf.mxu0
        %542 = vmatprep.mubr.bf16.mxu0 0
        %543 = vmatmul.mubr.bf16.gmra.mxu0 %v447
        %v544 = vpop.f32.mrf.mxu0
        %v545 = vadd.f32 0.0, %v544
        %v546 = vpop.f32.mrf.mxu0
        %v547 = vpop.f32.mrf.mxu0
        %v548 = vadd.f32 0.0, %v547
        %v549 = vpop.f32.mrf.mxu0
        %550 = vmatprep.mubr.bf16.mxu0 0
        %551 = vmatmul.mubr.bf16.gmra.mxu0 %v450
        %v552 = vpop.f32.mrf.mxu0
        %v553 = vadd.f32 0.0, %v552
        %v554 = vpop.f32.mrf.mxu0
        %v555 = vpop.f32.mrf.mxu0
        %v556 = vadd.f32 0.0, %v555
        %v557 = vpop.f32.mrf.mxu0
        %558 = vmatprep.mubr.bf16.mxu0 0
        %559 = vmatmul.mubr.bf16.gmra.mxu0 %v453
        %v560 = vpop.f32.mrf.mxu0
        %v561 = vadd.f32 0.0, %v560
        %v562 = vpop.f32.mrf.mxu0
        %v563 = vpop.f32.mrf.mxu0
        %v564 = vadd.f32 0.0, %v563
        %v565 = vpop.f32.mrf.mxu0
        %566 = vmatprep.mubr.bf16.mxu0 0
        %567 = vmatmul.mubr.bf16.gmra.mxu0 %v456
        %v568 = vpop.f32.mrf.mxu0
        %v569 = vadd.f32 0.0, %v568
        %v570 = vpop.f32.mrf.mxu0
        %v571 = vpop.f32.mrf.mxu0
        %v572 = vadd.f32 0.0, %v571
        %v573 = vpop.f32.mrf.mxu0
        %574 = vmatprep.mubr.bf16.mxu0 0
        %575 = vmatmul.mubr.bf16.gmra.mxu0 %v459
        %v576 = vpop.f32.mrf.mxu0
        %v577 = vadd.f32 0.0, %v576
        %v578 = vpop.f32.mrf.mxu0
        %v579 = vpop.f32.mrf.mxu0
        %v580 = vadd.f32 0.0, %v579
        %v581 = vpop.f32.mrf.mxu0
        %582 = vmatprep.mubr.bf16.mxu0 0
        %583 = vmatmul.mubr.bf16.gmra.mxu0 %v462
        %v584 = vpop.f32.mrf.mxu0
        %v585 = vadd.f32 0.0, %v584
        %v586 = vpop.f32.mrf.mxu0
        %v587 = vpop.f32.mrf.mxu0
        %v588 = vadd.f32 0.0, %v587
        %v589 = vpop.f32.mrf.mxu0
        %590 = vmatprep.mubr.bf16.mxu0 0
        %591 = vmatmul.mubr.bf16.gmra.mxu0 %v465
        %v592 = vpop.f32.mrf.mxu0
        %v593 = vadd.f32 0.0, %v592
        %v594 = vpop.f32.mrf.mxu0
        %v595 = vpop.f32.mrf.mxu0
        %v596 = vadd.f32 0.0, %v595
        %v597 = vpop.f32.mrf.mxu0
        %598 = vmatprep.mubr.bf16.mxu0 0
        %599 = vmatmul.mubr.bf16.gmra.mxu0 %v468
        %v600 = vpop.f32.mrf.mxu0
        %v601 = vadd.f32 0.0, %v600
        %v602 = vpop.f32.mrf.mxu0
        %v603 = vpop.f32.mrf.mxu0
        %v604 = vadd.f32 0.0, %v603
        %v605 = vpop.f32.mrf.mxu0
        %606 = vmatprep.mubr.bf16.mxu0 0
        %607 = vmatmul.mubr.bf16.gmra.mxu0 %v471
        %v608 = vpop.f32.mrf.mxu0
        %v609 = vadd.f32 0.0, %v608
        %v610 = vpop.f32.mrf.mxu0
        %v611 = vpop.f32.mrf.mxu0
        %v612 = vadd.f32 0.0, %v611
        %v613 = vpop.f32.mrf.mxu0
        %614 = vmatprep.mubr.bf16.mxu0 0
        %615 = vmatmul.mubr.bf16.gmra.mxu0 %v474
        %v616 = vpop.f32.mrf.mxu0
        %v617 = vadd.f32 0.0, %v616
        %v618 = vpop.f32.mrf.mxu0
        %v619 = vpop.f32.mrf.mxu0
        %v620 = vadd.f32 0.0, %v619
        %v621 = vpop.f32.mrf.mxu0
        %622 = vmatprep.mubr.bf16.mxu0 0
        %623 = vmatmul.mubr.bf16.gmra.mxu0 %v477
        %v624 = vpop.f32.mrf.mxu0
        %v625 = vadd.f32 0.0, %v624
        %v626 = vpop.f32.mrf.mxu0
        %v627 = vpop.f32.mrf.mxu0
        %v628 = vadd.f32 0.0, %v627
        %v629 = vpop.f32.mrf.mxu0
        %630 = vmatprep.mubr.bf16.mxu0 0
        %631 = vmatmul.mubr.bf16.gmra.mxu0 %v480
        %v632 = vpop.f32.mrf.mxu0
        %v633 = vadd.f32 0.0, %v632
        %v634 = vpop.f32.mrf.mxu0
        %v635 = vpop.f32.mrf.mxu0
        %v636 = vadd.f32 0.0, %v635
        %v637 = vpop.f32.mrf.mxu0
        %638 = vmatprep.mubr.bf16.mxu0 0
        %639 = vmatmul.mubr.bf16.gmra.mxu0 %v483
        %v640 = vpop.f32.mrf.mxu0
        %v641 = vadd.f32 0.0, %v640
        %v642 = vpop.f32.mrf.mxu0
        %v643 = vpop.f32.mrf.mxu0
        %v644 = vadd.f32 0.0, %v643
        %v645 = vpop.f32.mrf.mxu0
        %646 = vmatprep.mubr.bf16.mxu0 0
        %647 = vmatmul.mubr.bf16.gmra.mxu0 %v486
        %v648 = vpop.f32.mrf.mxu0
        %v649 = vadd.f32 0.0, %v648
        %v650 = vpop.f32.mrf.mxu0
        %v651 = vpop.f32.mrf.mxu0
        %v652 = vadd.f32 0.0, %v651
        %v653 = vpop.f32.mrf.mxu0
        %654 = vmatprep.mubr.bf16.mxu0 0
        %655 = vmatmul.mubr.bf16.gmra.mxu0 %v489
        %v656 = vpop.f32.mrf.mxu0
        %v657 = vadd.f32 0.0, %v656
        %v658 = vpop.f32.mrf.mxu0
        %v659 = vpop.f32.mrf.mxu0
        %v660 = vadd.f32 0.0, %v659
        %v661 = vpop.f32.mrf.mxu0
        %662 = vmatprep.mubr.bf16.mxu0 0
        %663 = vmatmul.mubr.bf16.gmra.mxu0 %v492
        %v664 = vpop.f32.mrf.mxu0
        %v665 = vadd.f32 0.0, %v664
        %v666 = vpop.f32.mrf.mxu0
        %v667 = vpop.f32.mrf.mxu0
        %v668 = vadd.f32 0.0, %v667
        %v669 = vpop.f32.mrf.mxu0
        %670 = vdwg.mxu0
        %v671 = vld [vmem:[%s2] sm:$0x1]
        %v673 = vlaneseq
        %v674 = vshrl.u32 %v673, 7
        %v675 = vsub.s32 0, %v674
        %v676 = vrot.slane %v671, %v675
        %v678 = vmul.f32 %v529, %v676
        %v679 = vmul.f32 %v532, %v676
        %v680 = vmul.f32 %v537, %v676
        %v681 = vmul.f32 %v540, %v676
        %v682 = vmul.f32 %v545, %v676
        %v683 = vmul.f32 %v548, %v676
        %v684 = vmul.f32 %v553, %v676
        %v685 = vmul.f32 %v556, %v676
        %v686 = vmul.f32 %v561, %v676
        %v687 = vmul.f32 %v564, %v676
        %v688 = vmul.f32 %v569, %v676
        %v689 = vmul.f32 %v572, %v676
        %v690 = vmul.f32 %v577, %v676
        %v691 = vmul.f32 %v580, %v676
        %v692 = vmul.f32 %v585, %v676
        %v693 = vmul.f32 %v588, %v676
        %v694 = vmul.f32 %v593, %v676
        %v695 = vmul.f32 %v596, %v676
        %v696 = vmul.f32 %v601, %v676
        %v697 = vmul.f32 %v604, %v676
        %v698 = vmul.f32 %v609, %v676
        %v699 = vmul.f32 %v612, %v676
        %v700 = vmul.f32 %v617, %v676
        %v701 = vmul.f32 %v620, %v676
        %v702 = vmul.f32 %v625, %v676
        %v703 = vmul.f32 %v628, %v676
        %v704 = vmul.f32 %v633, %v676
        %v705 = vmul.f32 %v636, %v676
        %v706 = vmul.f32 %v641, %v676
        %v707 = vmul.f32 %v644, %v676
        %v708 = vmul.f32 %v649, %v676
        %v709 = vmul.f32 %v652, %v676
        %v710 = vmul.f32 %v657, %v676
        %v711 = vmul.f32 %v660, %v676
        %v712 = vmul.f32 %v665, %v676
        %v713 = vmul.f32 %v668, %v676
        %v714 = vld [vmem:[%s3] sm:$0x1]
        %v716 = vlaneseq
        %v717 = vshrl.u32 %v716, 7
        %v718 = vsub.s32 0, %v717
        %v719 = vrot.slane %v714, %v718
        %v721 = vadd.f32 %v678, %v719
        %v722 = vadd.f32 %v679, %v719
        %v723 = vadd.f32 %v680, %v719
        %v724 = vadd.f32 %v681, %v719
        %v725 = vadd.f32 %v682, %v719
        %v726 = vadd.f32 %v683, %v719
        %v727 = vadd.f32 %v684, %v719
        %v728 = vadd.f32 %v685, %v719
        %v729 = vadd.f32 %v686, %v719
        %v730 = vadd.f32 %v687, %v719
        %v731 = vadd.f32 %v688, %v719
        %v732 = vadd.f32 %v689, %v719
        %v733 = vadd.f32 %v690, %v719
        %v734 = vadd.f32 %v691, %v719
        %v735 = vadd.f32 %v692, %v719
        %v736 = vadd.f32 %v693, %v719
        %v737 = vadd.f32 %v694, %v719
        %v738 = vadd.f32 %v695, %v719
        %v739 = vadd.f32 %v696, %v719
        %v740 = vadd.f32 %v697, %v719
        %v741 = vadd.f32 %v698, %v719
        %v742 = vadd.f32 %v699, %v719
        %v743 = vadd.f32 %v700, %v719
        %v744 = vadd.f32 %v701, %v719
        %v745 = vadd.f32 %v702, %v719
        %v746 = vadd.f32 %v703, %v719
        %v747 = vadd.f32 %v704, %v719
        %v748 = vadd.f32 %v705, %v719
        %v749 = vadd.f32 %v706, %v719
        %v750 = vadd.f32 %v707, %v719
        %v751 = vadd.f32 %v708, %v719
        %v752 = vadd.f32 %v709, %v719
        %v753 = vadd.f32 %v710, %v719
        %v754 = vadd.f32 %v711, %v719
        %v755 = vadd.f32 %v712, %v719
        %v756 = vadd.f32 %v713, %v719
        %v757 = vmax.f32 %v721, 0.0
        %v758 = vmax.f32 %v722, 0.0
        %v759 = vmax.f32 %v723, 0.0
        %v760 = vmax.f32 %v724, 0.0
        %v761 = vmax.f32 %v725, 0.0
        %v762 = vmax.f32 %v726, 0.0
        %v763 = vmax.f32 %v727, 0.0
        %v764 = vmax.f32 %v728, 0.0
        %v765 = vmax.f32 %v729, 0.0
        %v766 = vmax.f32 %v730, 0.0
        %v767 = vmax.f32 %v731, 0.0
        %v768 = vmax.f32 %v732, 0.0
        %v769 = vmax.f32 %v733, 0.0
        %v770 = vmax.f32 %v734, 0.0
        %v771 = vmax.f32 %v735, 0.0
        %v772 = vmax.f32 %v736, 0.0
        %v773 = vmax.f32 %v737, 0.0
        %v774 = vmax.f32 %v738, 0.0
        %v775 = vmax.f32 %v739, 0.0
        %v776 = vmax.f32 %v740, 0.0
        %v777 = vmax.f32 %v741, 0.0
        %v778 = vmax.f32 %v742, 0.0
        %v779 = vmax.f32 %v743, 0.0
        %v780 = vmax.f32 %v744, 0.0
        %v781 = vmax.f32 %v745, 0.0
        %v782 = vmax.f32 %v746, 0.0
        %v783 = vmax.f32 %v747, 0.0
        %v784 = vmax.f32 %v748, 0.0
        %v785 = vmax.f32 %v749, 0.0
        %v786 = vmax.f32 %v750, 0.0
        %v787 = vmax.f32 %v751, 0.0
        %v788 = vmax.f32 %v752, 0.0
        %v789 = vmax.f32 %v753, 0.0
        %v790 = vmax.f32 %v754, 0.0
        %v791 = vmax.f32 %v755, 0.0
        %v792 = vmax.f32 %v756, 0.0
        %p793 = scmp.eq.s32.totalorder %s29, 0
        %s794 = scalar_select %p793, 1, 0
        %v795 = vstv %s794
        %vm796 = vcmp.eq.s32.totalorder %v795, 1
        %v797 = vsel %vm796, 1, 0
        %vm798 = vcmp.eq.s32.totalorder %v797, 1
        %v799 = vsel %vm798, 0.0, %v757
        %v800 = vsel %vm798, 0.0, %v758
        %v801 = vsel 0, 0.0, %v759
        %v802 = vsel 0, 0.0, %v760
        %v803 = vsel 0, 0.0, %v761
        %v804 = vsel 0, 0.0, %v762
        %v805 = vsel 0, 0.0, %v763
        %v806 = vsel 0, 0.0, %v764
        %v807 = vsel 0, 0.0, %v765
        %v808 = vsel 0, 0.0, %v766
        %v809 = vsel 0, 0.0, %v767
        %v810 = vsel 0, 0.0, %v768
        %v811 = vsel 0, 0.0, %v769
        %v812 = vsel 0, 0.0, %v770
        %v813 = vsel 0, 0.0, %v771
        %v814 = vsel 0, 0.0, %v772
        %v815 = vsel 0, 0.0, %v773
        %v816 = vsel 0, 0.0, %v774
        %v817 = vsel 0, 0.0, %v775
        %v818 = vsel 0, 0.0, %v776
        %v819 = vsel 0, 0.0, %v777
        %v820 = vsel 0, 0.0, %v778
        %v821 = vsel 0, 0.0, %v779
        %v822 = vsel 0, 0.0, %v780
        %v823 = vsel 0, 0.0, %v781
        %v824 = vsel 0, 0.0, %v782
        %v825 = vsel 0, 0.0, %v783
        %v826 = vsel 0, 0.0, %v784
        %v827 = vsel 0, 0.0, %v785
        %v828 = vsel 0, 0.0, %v786
        %v829 = vsel 0, 0.0, %v787
        %v830 = vsel 0, 0.0, %v788
        %v831 = vsel 0, 0.0, %v789
        %v832 = vsel 0, 0.0, %v790
        %v833 = vsel %vm798, 0.0, %v791
        %v834 = vsel %vm798, 0.0, %v792
        %v835 = vpack.c.bf16 %v800, %v799
        %v836 = vpack.c.bf16 %v802, %v801
        %v837 = vpack.c.bf16 %v804, %v803
        %v838 = vpack.c.bf16 %v806, %v805
        %v839 = vpack.c.bf16 %v808, %v807
        %v840 = vpack.c.bf16 %v810, %v809
        %v841 = vpack.c.bf16 %v812, %v811
        %v842 = vpack.c.bf16 %v814, %v813
        %v843 = vpack.c.bf16 %v816, %v815
        %v844 = vpack.c.bf16 %v818, %v817
        %v845 = vpack.c.bf16 %v820, %v819
        %v846 = vpack.c.bf16 %v822, %v821
        %v847 = vpack.c.bf16 %v824, %v823
        %v848 = vpack.c.bf16 %v826, %v825
        %v849 = vpack.c.bf16 %v828, %v827
        %v850 = vpack.c.bf16 %v830, %v829
        %v851 = vpack.c.bf16 %v832, %v831
        %v852 = vpack.c.bf16 %v834, %v833
        %v854 = vshrl.u32 %v835, 16
        %v856 = vrot.slane %v854, 7
        %v857 = vshll.u32 %v835, 16
        %v859 = vor.u32 %v856, %v857
        %v861 = vshrl.u32 %v836, 16
        %v863 = vrot.slane %v861, 7
        %v864 = vshll.u32 %v836, 16
        %v866 = vor.u32 %v863, %v864
        %v868 = vshrl.u32 %v837, 16
        %v870 = vrot.slane %v868, 7
        %v871 = vshll.u32 %v837, 16
        %v873 = vor.u32 %v870, %v871
        %v875 = vshrl.u32 %v838, 16
        %v877 = vrot.slane %v875, 7
        %v878 = vshll.u32 %v838, 16
        %v880 = vor.u32 %v877, %v878
        %v882 = vshrl.u32 %v839, 16
        %v884 = vrot.slane %v882, 7
        %v885 = vshll.u32 %v839, 16
        %v887 = vor.u32 %v884, %v885
        %v889 = vshrl.u32 %v840, 16
        %v891 = vrot.slane %v889, 7
        %v892 = vshll.u32 %v840, 16
        %v894 = vor.u32 %v891, %v892
        %v896 = vshrl.u32 %v841, 16
        %v898 = vrot.slane %v896, 7
        %v899 = vshll.u32 %v841, 16
        %v901 = vor.u32 %v898, %v899
        %v903 = vshrl.u32 %v842, 16
        %v905 = vrot.slane %v903, 7
        %v906 = vshll.u32 %v842, 16
        %v908 = vor.u32 %v905, %v906
        %v910 = vshrl.u32 %v843, 16
        %v912 = vrot.slane %v910, 7
        %v913 = vshll.u32 %v843, 16
        %v915 = vor.u32 %v912, %v913
        %v917 = vshrl.u32 %v844, 16
        %v919 = vrot.slane %v917, 7
        %v920 = vshll.u32 %v844, 16
        %v922 = vor.u32 %v919, %v920
        %v924 = vshrl.u32 %v845, 16
        %v926 = vrot.slane %v924, 7
        %v927 = vshll.u32 %v845, 16
        %v929 = vor.u32 %v926, %v927
        %v931 = vshrl.u32 %v846, 16
        %v933 = vrot.slane %v931, 7
        %v934 = vshll.u32 %v846, 16
        %v936 = vor.u32 %v933, %v934
        %v938 = vshrl.u32 %v847, 16
        %v940 = vrot.slane %v938, 7
        %v941 = vshll.u32 %v847, 16
        %v943 = vor.u32 %v940, %v941
        %v945 = vshrl.u32 %v848, 16
        %v947 = vrot.slane %v945, 7
        %v948 = vshll.u32 %v848, 16
        %v950 = vor.u32 %v947, %v948
        %v952 = vshrl.u32 %v849, 16
        %v954 = vrot.slane %v952, 7
        %v955 = vshll.u32 %v849, 16
        %v957 = vor.u32 %v954, %v955
        %v959 = vshrl.u32 %v850, 16
        %v961 = vrot.slane %v959, 7
        %v962 = vshll.u32 %v850, 16
        %v964 = vor.u32 %v961, %v962
        %v966 = vshrl.u32 %v851, 16
        %v968 = vrot.slane %v966, 7
        %v969 = vshll.u32 %v851, 16
        %v971 = vor.u32 %v968, %v969
        %v973 = vshrl.u32 %v852, 16
        %v975 = vrot.slane %v973, 7
        %v976 = vshll.u32 %v852, 16
        %v978 = vor.u32 %v975, %v976
        %vm1015 = vcmask 1040384
        %vm1016 = vsmask.f32 256
        %vm1017 = vmand %vm1015, %vm1016
        %v1018 = vsel %vm1017, 0, %v859
        %v1019 = vsel %vm1017, 0, %v866
        %v1020 = vsel %vm1017, 0, %v873
        %v1021 = vsel %vm1017, 0, %v880
        %v1022 = vsel %vm1017, 0, %v887
        %v1023 = vsel %vm1017, 0, %v894
        %v1024 = vsel %vm1017, 0, %v901
        %v1025 = vsel %vm1017, 0, %v908
        %v1026 = vsel %vm1017, 0, %v915
        %v1027 = vsel %vm1017, 0, %v922
        %v1028 = vsel %vm1017, 0, %v929
        %v1029 = vsel %vm1017, 0, %v936
        %v1030 = vsel %vm1017, 0, %v943
        %v1031 = vsel %vm1017, 0, %v950
        %v1032 = vsel %vm1017, 0, %v957
        %v1033 = vsel %vm1017, 0, %v964
        %v1034 = vsel %vm1017, 0, %v971
        %v1035 = vsel %vm1017, 0, %v978
        %v1036 = vsel %vm1017, %v856, 0
        %v1037 = vsel %vm1017, %v863, 0
        %v1038 = vsel %vm1017, %v870, 0
        %v1039 = vsel %vm1017, %v877, 0
        %v1040 = vsel %vm1017, %v884, 0
        %v1041 = vsel %vm1017, %v891, 0
        %v1042 = vsel %vm1017, %v898, 0
        %v1043 = vsel %vm1017, %v905, 0
        %v1044 = vsel %vm1017, %v912, 0
        %v1045 = vsel %vm1017, %v919, 0
        %v1046 = vsel %vm1017, %v926, 0
        %v1047 = vsel %vm1017, %v933, 0
        %v1048 = vsel %vm1017, %v940, 0
        %v1049 = vsel %vm1017, %v947, 0
        %v1050 = vsel %vm1017, %v954, 0
        %v1051 = vsel %vm1017, %v961, 0
        %v1052 = vsel %vm1017, %v968, 0
        %v1053 = vsel %vm1017, %v975, 0
        %vm1054 = vsmask.f32 7424
        %v1056 = vshrl.u32 %v1018, 16
        %v1058 = vshll.u32 %v1018, 16
        %v1060 = vrot.slane %v1058, 1
        %v1061 = vor.u32 %v1056, %v1060
        %v1063 = vshll.u32 %v1036, 16
        %v1065 = vrot.slane %v1063, 1
        %v1066 = vsel %vm1054, %v1061, %v1065
        %v1068 = vshrl.u32 %v1019, 16
        %v1070 = vshll.u32 %v1019, 16
        %v1072 = vrot.slane %v1070, 1
        %v1073 = vor.u32 %v1068, %v1072
        %v1075 = vshll.u32 %v1037, 16
        %v1077 = vrot.slane %v1075, 1
        %v1078 = vsel %vm1054, %v1073, %v1077
        %v1080 = vshrl.u32 %v1020, 16
        %v1082 = vshll.u32 %v1020, 16
        %v1084 = vrot.slane %v1082, 1
        %v1085 = vor.u32 %v1080, %v1084
        %v1087 = vshll.u32 %v1038, 16
        %v1089 = vrot.slane %v1087, 1
        %v1090 = vsel %vm1054, %v1085, %v1089
        %v1092 = vshrl.u32 %v1021, 16
        %v1094 = vshll.u32 %v1021, 16
        %v1096 = vrot.slane %v1094, 1
        %v1097 = vor.u32 %v1092, %v1096
        %v1099 = vshll.u32 %v1039, 16
        %v1101 = vrot.slane %v1099, 1
        %v1102 = vsel %vm1054, %v1097, %v1101
        %v1104 = vshrl.u32 %v1022, 16
        %v1106 = vshll.u32 %v1022, 16
        %v1108 = vrot.slane %v1106, 1
        %v1109 = vor.u32 %v1104, %v1108
        %v1111 = vshll.u32 %v1040, 16
        %v1113 = vrot.slane %v1111, 1
        %v1114 = vsel %vm1054, %v1109, %v1113
        %v1116 = vshrl.u32 %v1023, 16
        %v1118 = vshll.u32 %v1023, 16
        %v1120 = vrot.slane %v1118, 1
        %v1121 = vor.u32 %v1116, %v1120
        %v1123 = vshll.u32 %v1041, 16
        %v1125 = vrot.slane %v1123, 1
        %v1126 = vsel %vm1054, %v1121, %v1125
        %v1128 = vshrl.u32 %v1024, 16
        %v1130 = vshll.u32 %v1024, 16
        %v1132 = vrot.slane %v1130, 1
        %v1133 = vor.u32 %v1128, %v1132
        %v1135 = vshll.u32 %v1042, 16
        %v1137 = vrot.slane %v1135, 1
        %v1138 = vsel %vm1054, %v1133, %v1137
        %v1140 = vshrl.u32 %v1025, 16
        %v1142 = vshll.u32 %v1025, 16
        %v1144 = vrot.slane %v1142, 1
        %v1145 = vor.u32 %v1140, %v1144
        %v1147 = vshll.u32 %v1043, 16
        %v1149 = vrot.slane %v1147, 1
        %v1150 = vsel %vm1054, %v1145, %v1149
        %v1152 = vshrl.u32 %v1026, 16
        %v1154 = vshll.u32 %v1026, 16
        %v1156 = vrot.slane %v1154, 1
        %v1157 = vor.u32 %v1152, %v1156
        %v1159 = vshll.u32 %v1044, 16
        %v1161 = vrot.slane %v1159, 1
        %v1162 = vsel %vm1054, %v1157, %v1161
        %v1164 = vshrl.u32 %v1027, 16
        %v1166 = vshll.u32 %v1027, 16
        %v1168 = vrot.slane %v1166, 1
        %v1169 = vor.u32 %v1164, %v1168
        %v1171 = vshll.u32 %v1045, 16
        %v1173 = vrot.slane %v1171, 1
        %v1174 = vsel %vm1054, %v1169, %v1173
        %v1176 = vshrl.u32 %v1028, 16
        %v1178 = vshll.u32 %v1028, 16
        %v1180 = vrot.slane %v1178, 1
        %v1181 = vor.u32 %v1176, %v1180
        %v1183 = vshll.u32 %v1046, 16
        %v1185 = vrot.slane %v1183, 1
        %v1186 = vsel %vm1054, %v1181, %v1185
        %v1188 = vshrl.u32 %v1029, 16
        %v1190 = vshll.u32 %v1029, 16
        %v1192 = vrot.slane %v1190, 1
        %v1193 = vor.u32 %v1188, %v1192
        %v1195 = vshll.u32 %v1047, 16
        %v1197 = vrot.slane %v1195, 1
        %v1198 = vsel %vm1054, %v1193, %v1197
        %v1200 = vshrl.u32 %v1030, 16
        %v1202 = vshll.u32 %v1030, 16
        %v1204 = vrot.slane %v1202, 1
        %v1205 = vor.u32 %v1200, %v1204
        %v1207 = vshll.u32 %v1048, 16
        %v1209 = vrot.slane %v1207, 1
        %v1210 = vsel %vm1054, %v1205, %v1209
        %v1212 = vshrl.u32 %v1031, 16
        %v1214 = vshll.u32 %v1031, 16
        %v1216 = vrot.slane %v1214, 1
        %v1217 = vor.u32 %v1212, %v1216
        %v1219 = vshll.u32 %v1049, 16
        %v1221 = vrot.slane %v1219, 1
        %v1222 = vsel %vm1054, %v1217, %v1221
        %v1224 = vshrl.u32 %v1032, 16
        %v1226 = vshll.u32 %v1032, 16
        %v1228 = vrot.slane %v1226, 1
        %v1229 = vor.u32 %v1224, %v1228
        %v1231 = vshll.u32 %v1050, 16
        %v1233 = vrot.slane %v1231, 1
        %v1234 = vsel %vm1054, %v1229, %v1233
        %v1236 = vshrl.u32 %v1033, 16
        %v1238 = vshll.u32 %v1033, 16
        %v1240 = vrot.slane %v1238, 1
        %v1241 = vor.u32 %v1236, %v1240
        %v1243 = vshll.u32 %v1051, 16
        %v1245 = vrot.slane %v1243, 1
        %v1246 = vsel %vm1054, %v1241, %v1245
        %1247 = vrot.lane.b32.xlu0 %v1066, 4
        %v1248 = vpop.permute.xlu0 %1247
        %1249 = vrot.lane.b32.xlu0 %v1078, 4
        %v1250 = vpop.permute.xlu0 %1249
        %1251 = vrot.lane.b32.xlu0 %v1090, 4
        %v1252 = vpop.permute.xlu0 %1251
        %1253 = vrot.lane.b32.xlu0 %v1102, 4
        %v1254 = vpop.permute.xlu0 %1253
        %1255 = vrot.lane.b32.xlu0 %v1114, 4
        %v1256 = vpop.permute.xlu0 %1255
        %1257 = vrot.lane.b32.xlu0 %v1126, 4
        %v1258 = vpop.permute.xlu0 %1257
        %1259 = vrot.lane.b32.xlu0 %v1138, 4
        %v1260 = vpop.permute.xlu0 %1259
        %1261 = vrot.lane.b32.xlu0 %v1150, 4
        %v1262 = vpop.permute.xlu0 %1261
        %1263 = vrot.lane.b32.xlu0 %v1162, 4
        %v1264 = vpop.permute.xlu0 %1263
        %1265 = vrot.lane.b32.xlu0 %v1174, 4
        %v1266 = vpop.permute.xlu0 %1265
        %1267 = vrot.lane.b32.xlu0 %v1186, 4
        %v1268 = vpop.permute.xlu0 %1267
        %1269 = vrot.lane.b32.xlu0 %v1198, 4
        %v1270 = vpop.permute.xlu0 %1269
        %1271 = vrot.lane.b32.xlu0 %v1210, 4
        %v1272 = vpop.permute.xlu0 %1271
        %1273 = vrot.lane.b32.xlu0 %v1222, 4
        %v1274 = vpop.permute.xlu0 %1273
        %1275 = vrot.lane.b32.xlu0 %v1234, 4
        %v1276 = vpop.permute.xlu0 %1275
        %1277 = vrot.lane.b32.xlu0 %v1246, 4
        %v1278 = vpop.permute.xlu0 %1277
        %vm1311 = vcmask 1046528
        %v1312 = vrot.slane %v1018, 1
        %v1313 = vrot.slane %v1036, 1
        %v1314 = vsel %vm1311, %v1312, %v1313
        %v1315 = vrot.slane %v1019, 1
        %v1316 = vrot.slane %v1037, 1
        %v1317 = vsel %vm1311, %v1315, %v1316
        %v1318 = vrot.slane %v1020, 1
        %v1319 = vrot.slane %v1038, 1
        %v1320 = vsel %vm1311, %v1318, %v1319
        %v1321 = vrot.slane %v1021, 1
        %v1322 = vrot.slane %v1039, 1
        %v1323 = vsel %vm1311, %v1321, %v1322
        %v1324 = vrot.slane %v1022, 1
        %v1325 = vrot.slane %v1040, 1
        %v1326 = vsel %vm1311, %v1324, %v1325
        %v1327 = vrot.slane %v1023, 1
        %v1328 = vrot.slane %v1041, 1
        %v1329 = vsel %vm1311, %v1327, %v1328
        %v1330 = vrot.slane %v1024, 1
        %v1331 = vrot.slane %v1042, 1
        %v1332 = vsel %vm1311, %v1330, %v1331
        %v1333 = vrot.slane %v1025, 1
        %v1334 = vrot.slane %v1043, 1
        %v1335 = vsel %vm1311, %v1333, %v1334
        %v1336 = vrot.slane %v1026, 1
        %v1337 = vrot.slane %v1044, 1
        %v1338 = vsel %vm1311, %v1336, %v1337
        %v1339 = vrot.slane %v1027, 1
        %v1340 = vrot.slane %v1045, 1
        %v1341 = vsel %vm1311, %v1339, %v1340
        %v1342 = vrot.slane %v1028, 1
        %v1343 = vrot.slane %v1046, 1
        %v1344 = vsel %vm1311, %v1342, %v1343
        %v1345 = vrot.slane %v1029, 1
        %v1346 = vrot.slane %v1047, 1
        %v1347 = vsel %vm1311, %v1345, %v1346
        %v1348 = vrot.slane %v1030, 1
        %v1349 = vrot.slane %v1048, 1
        %v1350 = vsel %vm1311, %v1348, %v1349
        %v1351 = vrot.slane %v1031, 1
        %v1352 = vrot.slane %v1049, 1
        %v1353 = vsel %vm1311, %v1351, %v1352
        %v1354 = vrot.slane %v1032, 1
        %v1355 = vrot.slane %v1050, 1
        %v1356 = vsel %vm1311, %v1354, %v1355
        %v1357 = vrot.slane %v1033, 1
        %v1358 = vrot.slane %v1051, 1
        %v1359 = vsel %vm1311, %v1357, %v1358
        %1360 = vrot.lane.b32.xlu0 %v1314, 8
        %v1361 = vpop.permute.xlu0 %1360
        %1362 = vrot.lane.b32.xlu0 %v1317, 8
        %v1363 = vpop.permute.xlu0 %1362
        %1364 = vrot.lane.b32.xlu0 %v1320, 8
        %v1365 = vpop.permute.xlu0 %1364
        %1366 = vrot.lane.b32.xlu0 %v1323, 8
        %v1367 = vpop.permute.xlu0 %1366
        %1368 = vrot.lane.b32.xlu0 %v1326, 8
        %v1369 = vpop.permute.xlu0 %1368
        %1370 = vrot.lane.b32.xlu0 %v1329, 8
        %v1371 = vpop.permute.xlu0 %1370
        %1372 = vrot.lane.b32.xlu0 %v1332, 8
        %v1373 = vpop.permute.xlu0 %1372
        %1374 = vrot.lane.b32.xlu0 %v1335, 8
        %v1375 = vpop.permute.xlu0 %1374
        %1376 = vrot.lane.b32.xlu0 %v1338, 8
        %v1377 = vpop.permute.xlu0 %1376
        %1378 = vrot.lane.b32.xlu0 %v1341, 8
        %v1379 = vpop.permute.xlu0 %1378
        %1380 = vrot.lane.b32.xlu0 %v1344, 8
        %v1381 = vpop.permute.xlu0 %1380
        %1382 = vrot.lane.b32.xlu0 %v1347, 8
        %v1383 = vpop.permute.xlu0 %1382
        %1384 = vrot.lane.b32.xlu0 %v1350, 8
        %v1385 = vpop.permute.xlu0 %1384
        %1386 = vrot.lane.b32.xlu0 %v1353, 8
        %v1387 = vpop.permute.xlu0 %1386
        %1388 = vrot.lane.b32.xlu0 %v1356, 8
        %v1389 = vpop.permute.xlu0 %1388
        %1390 = vrot.lane.b32.xlu0 %v1359, 8
        %v1391 = vpop.permute.xlu0 %1390
        %1393 = vrot.lane.b32.xlu0 %v1019, 12
        %v1394 = vpop.permute.xlu0 %1393
        %1395 = vrot.lane.b32.xlu0 %v1020, 12
        %v1396 = vpop.permute.xlu0 %1395
        %1397 = vrot.lane.b32.xlu0 %v1021, 12
        %v1398 = vpop.permute.xlu0 %1397
        %1399 = vrot.lane.b32.xlu0 %v1022, 12
        %v1400 = vpop.permute.xlu0 %1399
        %1401 = vrot.lane.b32.xlu0 %v1023, 12
        %v1402 = vpop.permute.xlu0 %1401
        %1403 = vrot.lane.b32.xlu0 %v1024, 12
        %v1404 = vpop.permute.xlu0 %1403
        %1405 = vrot.lane.b32.xlu0 %v1025, 12
        %v1406 = vpop.permute.xlu0 %1405
        %1407 = vrot.lane.b32.xlu0 %v1026, 12
        %v1408 = vpop.permute.xlu0 %1407
        %1409 = vrot.lane.b32.xlu0 %v1027, 12
        %v1410 = vpop.permute.xlu0 %1409
        %1411 = vrot.lane.b32.xlu0 %v1028, 12
        %v1412 = vpop.permute.xlu0 %1411
        %1413 = vrot.lane.b32.xlu0 %v1029, 12
        %v1414 = vpop.permute.xlu0 %1413
        %1415 = vrot.lane.b32.xlu0 %v1030, 12
        %v1416 = vpop.permute.xlu0 %1415
        %1417 = vrot.lane.b32.xlu0 %v1031, 12
        %v1418 = vpop.permute.xlu0 %1417
        %1419 = vrot.lane.b32.xlu0 %v1032, 12
        %v1420 = vpop.permute.xlu0 %1419
        %1421 = vrot.lane.b32.xlu0 %v1033, 12
        %v1422 = vpop.permute.xlu0 %1421
        %1423 = vrot.lane.b32.xlu0 %v1034, 12
        %v1424 = vpop.permute.xlu0 %1423
        %v1426 = vshrl.u32 %v1034, 16
        %v1428 = vshll.u32 %v1034, 16
        %v1430 = vrot.slane %v1428, 1
        %v1431 = vor.u32 %v1426, %v1430
        %v1433 = vshll.u32 %v1052, 16
        %v1435 = vrot.slane %v1433, 1
        %v1436 = vsel %vm1054, %v1431, %v1435
        %1437 = vrot.lane.b32.xlu0 %v1078, 16
        %v1438 = vpop.permute.xlu0 %1437
        %1439 = vrot.lane.b32.xlu0 %v1090, 16
        %v1440 = vpop.permute.xlu0 %1439
        %1441 = vrot.lane.b32.xlu0 %v1102, 16
        %v1442 = vpop.permute.xlu0 %1441
        %1443 = vrot.lane.b32.xlu0 %v1114, 16
        %v1444 = vpop.permute.xlu0 %1443
        %1445 = vrot.lane.b32.xlu0 %v1126, 16
        %v1446 = vpop.permute.xlu0 %1445
        %1447 = vrot.lane.b32.xlu0 %v1138, 16
        %v1448 = vpop.permute.xlu0 %1447
        %1449 = vrot.lane.b32.xlu0 %v1150, 16
        %v1450 = vpop.permute.xlu0 %1449
        %1451 = vrot.lane.b32.xlu0 %v1162, 16
        %v1452 = vpop.permute.xlu0 %1451
        %1453 = vrot.lane.b32.xlu0 %v1174, 16
        %v1454 = vpop.permute.xlu0 %1453
        %1455 = vrot.lane.b32.xlu0 %v1186, 16
        %v1456 = vpop.permute.xlu0 %1455
        %1457 = vrot.lane.b32.xlu0 %v1198, 16
        %v1458 = vpop.permute.xlu0 %1457
        %1459 = vrot.lane.b32.xlu0 %v1210, 16
        %v1460 = vpop.permute.xlu0 %1459
        %1461 = vrot.lane.b32.xlu0 %v1222, 16
        %v1462 = vpop.permute.xlu0 %1461
        %1463 = vrot.lane.b32.xlu0 %v1234, 16
        %v1464 = vpop.permute.xlu0 %1463
        %1465 = vrot.lane.b32.xlu0 %v1246, 16
        %v1466 = vpop.permute.xlu0 %1465
        %1467 = vrot.lane.b32.xlu0 %v1436, 16
        %v1468 = vpop.permute.xlu0 %1467
        %v1470 = vrot.slane %v1034, 1
        %v1471 = vrot.slane %v1052, 1
        %v1472 = vsel %vm1311, %v1470, %v1471
        %1473 = vrot.lane.b32.xlu0 %v1317, 20
        %v1474 = vpop.permute.xlu0 %1473
        %1475 = vrot.lane.b32.xlu0 %v1320, 20
        %v1476 = vpop.permute.xlu0 %1475
        %1477 = vrot.lane.b32.xlu0 %v1323, 20
        %v1478 = vpop.permute.xlu0 %1477
        %1479 = vrot.lane.b32.xlu0 %v1326, 20
        %v1480 = vpop.permute.xlu0 %1479
        %1481 = vrot.lane.b32.xlu0 %v1329, 20
        %v1482 = vpop.permute.xlu0 %1481
        %1483 = vrot.lane.b32.xlu0 %v1332, 20
        %v1484 = vpop.permute.xlu0 %1483
        %1485 = vrot.lane.b32.xlu0 %v1335, 20
        %v1486 = vpop.permute.xlu0 %1485
        %1487 = vrot.lane.b32.xlu0 %v1338, 20
        %v1488 = vpop.permute.xlu0 %1487
        %1489 = vrot.lane.b32.xlu0 %v1341, 20
        %v1490 = vpop.permute.xlu0 %1489
        %1491 = vrot.lane.b32.xlu0 %v1344, 20
        %v1492 = vpop.permute.xlu0 %1491
        %1493 = vrot.lane.b32.xlu0 %v1347, 20
        %v1494 = vpop.permute.xlu0 %1493
        %1495 = vrot.lane.b32.xlu0 %v1350, 20
        %v1496 = vpop.permute.xlu0 %1495
        %1497 = vrot.lane.b32.xlu0 %v1353, 20
        %v1498 = vpop.permute.xlu0 %1497
        %1499 = vrot.lane.b32.xlu0 %v1356, 20
        %v1500 = vpop.permute.xlu0 %1499
        %1501 = vrot.lane.b32.xlu0 %v1359, 20
        %v1502 = vpop.permute.xlu0 %1501
        %1503 = vrot.lane.b32.xlu0 %v1472, 20
        %v1504 = vpop.permute.xlu0 %1503
        %1506 = vrot.lane.b32.xlu0 %v1020, 24
        %v1507 = vpop.permute.xlu0 %1506
        %1508 = vrot.lane.b32.xlu0 %v1021, 24
        %v1509 = vpop.permute.xlu0 %1508
        %1510 = vrot.lane.b32.xlu0 %v1022, 24
        %v1511 = vpop.permute.xlu0 %1510
        %1512 = vrot.lane.b32.xlu0 %v1023, 24
        %v1513 = vpop.permute.xlu0 %1512
        %1514 = vrot.lane.b32.xlu0 %v1024, 24
        %v1515 = vpop.permute.xlu0 %1514
        %1516 = vrot.lane.b32.xlu0 %v1025, 24
        %v1517 = vpop.permute.xlu0 %1516
        %1518 = vrot.lane.b32.xlu0 %v1026, 24
        %v1519 = vpop.permute.xlu0 %1518
        %1520 = vrot.lane.b32.xlu0 %v1027, 24
        %v1521 = vpop.permute.xlu0 %1520
        %1522 = vrot.lane.b32.xlu0 %v1028, 24
        %v1523 = vpop.permute.xlu0 %1522
        %1524 = vrot.lane.b32.xlu0 %v1029, 24
        %v1525 = vpop.permute.xlu0 %1524
        %1526 = vrot.lane.b32.xlu0 %v1030, 24
        %v1527 = vpop.permute.xlu0 %1526
        %1528 = vrot.lane.b32.xlu0 %v1031, 24
        %v1529 = vpop.permute.xlu0 %1528
        %1530 = vrot.lane.b32.xlu0 %v1032, 24
        %v1531 = vpop.permute.xlu0 %1530
        %1532 = vrot.lane.b32.xlu0 %v1033, 24
        %v1533 = vpop.permute.xlu0 %1532
        %1534 = vrot.lane.b32.xlu0 %v1034, 24
        %v1535 = vpop.permute.xlu0 %1534
        %1536 = vrot.lane.b32.xlu0 %v1035, 24
        %v1537 = vpop.permute.xlu0 %1536
        %v1539 = vshrl.u32 %v1035, 16
        %v1541 = vshll.u32 %v1035, 16
        %v1543 = vrot.slane %v1541, 1
        %v1544 = vor.u32 %v1539, %v1543
        %v1546 = vshll.u32 %v1053, 16
        %v1548 = vrot.slane %v1546, 1
        %v1549 = vsel %vm1054, %v1544, %v1548
        %1550 = vrot.lane.b32.xlu0 %v1090, 28
        %v1551 = vpop.permute.xlu0 %1550
        %1552 = vrot.lane.b32.xlu0 %v1102, 28
        %v1553 = vpop.permute.xlu0 %1552
        %1554 = vrot.lane.b32.xlu0 %v1114, 28
        %v1555 = vpop.permute.xlu0 %1554
        %1556 = vrot.lane.b32.xlu0 %v1126, 28
        %v1557 = vpop.permute.xlu0 %1556
        %1558 = vrot.lane.b32.xlu0 %v1138, 28
        %v1559 = vpop.permute.xlu0 %1558
        %1560 = vrot.lane.b32.xlu0 %v1150, 28
        %v1561 = vpop.permute.xlu0 %1560
        %1562 = vrot.lane.b32.xlu0 %v1162, 28
        %v1563 = vpop.permute.xlu0 %1562
        %1564 = vrot.lane.b32.xlu0 %v1174, 28
        %v1565 = vpop.permute.xlu0 %1564
        %1566 = vrot.lane.b32.xlu0 %v1186, 28
        %v1567 = vpop.permute.xlu0 %1566
        %1568 = vrot.lane.b32.xlu0 %v1198, 28
        %v1569 = vpop.permute.xlu0 %1568
        %1570 = vrot.lane.b32.xlu0 %v1210, 28
        %v1571 = vpop.permute.xlu0 %1570
        %1572 = vrot.lane.b32.xlu0 %v1222, 28
        %v1573 = vpop.permute.xlu0 %1572
        %1574 = vrot.lane.b32.xlu0 %v1234, 28
        %v1575 = vpop.permute.xlu0 %1574
        %1576 = vrot.lane.b32.xlu0 %v1246, 28
        %v1577 = vpop.permute.xlu0 %1576
        %1578 = vrot.lane.b32.xlu0 %v1436, 28
        %v1579 = vpop.permute.xlu0 %1578
        %1580 = vrot.lane.b32.xlu0 %v1549, 28
        %v1581 = vpop.permute.xlu0 %1580
        %v1583 = vrot.slane %v1035, 1
        %v1584 = vrot.slane %v1053, 1
        %v1585 = vsel %vm1311, %v1583, %v1584
        %1586 = vrot.lane.b32.xlu0 %v1320, 32
        %v1587 = vpop.permute.xlu0 %1586
        %1588 = vrot.lane.b32.xlu0 %v1323, 32
        %v1589 = vpop.permute.xlu0 %1588
        %1590 = vrot.lane.b32.xlu0 %v1326, 32
        %v1591 = vpop.permute.xlu0 %1590
        %1592 = vrot.lane.b32.xlu0 %v1329, 32
        %v1593 = vpop.permute.xlu0 %1592
        %1594 = vrot.lane.b32.xlu0 %v1332, 32
        %v1595 = vpop.permute.xlu0 %1594
        %1596 = vrot.lane.b32.xlu0 %v1335, 32
        %v1597 = vpop.permute.xlu0 %1596
        %1598 = vrot.lane.b32.xlu0 %v1338, 32
        %v1599 = vpop.permute.xlu0 %1598
        %1600 = vrot.lane.b32.xlu0 %v1341, 32
        %v1601 = vpop.permute.xlu0 %1600
        %1602 = vrot.lane.b32.xlu0 %v1344, 32
        %v1603 = vpop.permute.xlu0 %1602
        %1604 = vrot.lane.b32.xlu0 %v1347, 32
        %v1605 = vpop.permute.xlu0 %1604
        %1606 = vrot.lane.b32.xlu0 %v1350, 32
        %v1607 = vpop.permute.xlu0 %1606
        %1608 = vrot.lane.b32.xlu0 %v1353, 32
        %v1609 = vpop.permute.xlu0 %1608
        %1610 = vrot.lane.b32.xlu0 %v1356, 32
        %v1611 = vpop.permute.xlu0 %1610
        %1612 = vrot.lane.b32.xlu0 %v1359, 32
        %v1613 = vpop.permute.xlu0 %1612
        %1614 = vrot.lane.b32.xlu0 %v1472, 32
        %v1615 = vpop.permute.xlu0 %1614
        %1616 = vrot.lane.b32.xlu0 %v1585, 32
        %v1617 = vpop.permute.xlu0 %1616
        %vm1618 = vcmask 31744
        %v1620 = vsel %vm1618, %v1018, %v1248
        %v1622 = vsel %vm1618, %v1019, %v1250
        %v1624 = vsel %vm1618, %v1020, %v1252
        %v1626 = vsel %vm1618, %v1021, %v1254
        %v1628 = vsel %vm1618, %v1022, %v1256
        %v1630 = vsel %vm1618, %v1023, %v1258
        %v1632 = vsel %vm1618, %v1024, %v1260
        %v1634 = vsel %vm1618, %v1025, %v1262
        %v1636 = vsel %vm1618, %v1026, %v1264
        %v1638 = vsel %vm1618, %v1027, %v1266
        %v1640 = vsel %vm1618, %v1028, %v1268
        %v1642 = vsel %vm1618, %v1029, %v1270
        %v1644 = vsel %vm1618, %v1030, %v1272
        %v1646 = vsel %vm1618, %v1031, %v1274
        %v1648 = vsel %vm1618, %v1032, %v1276
        %v1650 = vsel %vm1618, %v1033, %v1278
        %vm1651 = vcmask 64512
        %v1653 = vsel %vm1651, %v1620, %v1361
        %v1655 = vsel %vm1651, %v1622, %v1363
        %v1657 = vsel %vm1651, %v1624, %v1365
        %v1659 = vsel %vm1651, %v1626, %v1367
        %v1661 = vsel %vm1651, %v1628, %v1369
        %v1663 = vsel %vm1651, %v1630, %v1371
        %v1665 = vsel %vm1651, %v1632, %v1373
        %v1667 = vsel %vm1651, %v1634, %v1375
        %v1669 = vsel %vm1651, %v1636, %v1377
        %v1671 = vsel %vm1651, %v1638, %v1379
        %v1673 = vsel %vm1651, %v1640, %v1381
        %v1675 = vsel %vm1651, %v1642, %v1383
        %v1677 = vsel %vm1651, %v1644, %v1385
        %v1679 = vsel %vm1651, %v1646, %v1387
        %v1681 = vsel %vm1651, %v1648, %v1389
        %v1683 = vsel %vm1651, %v1650, %v1391
        %vm1684 = vcmask 97280
        %v1686 = vsel %vm1684, %v1653, %v1394
        %v1688 = vsel %vm1684, %v1655, %v1396
        %v1690 = vsel %vm1684, %v1657, %v1398
        %v1692 = vsel %vm1684, %v1659, %v1400
        %v1694 = vsel %vm1684, %v1661, %v1402
        %v1696 = vsel %vm1684, %v1663, %v1404
        %v1698 = vsel %vm1684, %v1665, %v1406
        %v1700 = vsel %vm1684, %v1667, %v1408
        %v1702 = vsel %vm1684, %v1669, %v1410
        %v1704 = vsel %vm1684, %v1671, %v1412
        %v1706 = vsel %vm1684, %v1673, %v1414
        %v1708 = vsel %vm1684, %v1675, %v1416
        %v1710 = vsel %vm1684, %v1677, %v1418
        %v1712 = vsel %vm1684, %v1679, %v1420
        %v1714 = vsel %vm1684, %v1681, %v1422
        %v1716 = vsel %vm1684, %v1683, %v1424
        %v1718 = vsel %vm439, %v1686, %v1438
        %v1720 = vsel %vm439, %v1688, %v1440
        %v1722 = vsel %vm439, %v1690, %v1442
        %v1724 = vsel %vm439, %v1692, %v1444
        %v1726 = vsel %vm439, %v1694, %v1446
        %v1728 = vsel %vm439, %v1696, %v1448
        %v1730 = vsel %vm439, %v1698, %v1450
        %v1732 = vsel %vm439, %v1700, %v1452
        %v1734 = vsel %vm439, %v1702, %v1454
        %v1736 = vsel %vm439, %v1704, %v1456
        %v1738 = vsel %vm439, %v1706, %v1458
        %v1740 = vsel %vm439, %v1708, %v1460
        %v1742 = vsel %vm439, %v1710, %v1462
        %v1744 = vsel %vm439, %v1712, %v1464
        %v1746 = vsel %vm439, %v1714, %v1466
        %v1748 = vsel %vm439, %v1716, %v1468
        %vm1749 = vcmask 162816
        %v1751 = vsel %vm1749, %v1718, %v1474
        %v1753 = vsel %vm1749, %v1720, %v1476
        %v1755 = vsel %vm1749, %v1722, %v1478
        %v1757 = vsel %vm1749, %v1724, %v1480
        %v1759 = vsel %vm1749, %v1726, %v1482
        %v1761 = vsel %vm1749, %v1728, %v1484
        %v1763 = vsel %vm1749, %v1730, %v1486
        %v1765 = vsel %vm1749, %v1732, %v1488
        %v1767 = vsel %vm1749, %v1734, %v1490
        %v1769 = vsel %vm1749, %v1736, %v1492
        %v1771 = vsel %vm1749, %v1738, %v1494
        %v1773 = vsel %vm1749, %v1740, %v1496
        %v1775 = vsel %vm1749, %v1742, %v1498
        %v1777 = vsel %vm1749, %v1744, %v1500
        %v1779 = vsel %vm1749, %v1746, %v1502
        %v1781 = vsel %vm1749, %v1748, %v1504
        %vm1782 = vcmask 195584
        %v1784 = vsel %vm1782, %v1751, %v1507
        %v1786 = vsel %vm1782, %v1753, %v1509
        %v1788 = vsel %vm1782, %v1755, %v1511
        %v1790 = vsel %vm1782, %v1757, %v1513
        %v1792 = vsel %vm1782, %v1759, %v1515
        %v1794 = vsel %vm1782, %v1761, %v1517
        %v1796 = vsel %vm1782, %v1763, %v1519
        %v1798 = vsel %vm1782, %v1765, %v1521
        %v1800 = vsel %vm1782, %v1767, %v1523
        %v1802 = vsel %vm1782, %v1769, %v1525
        %v1804 = vsel %vm1782, %v1771, %v1527
        %v1806 = vsel %vm1782, %v1773, %v1529
        %v1808 = vsel %vm1782, %v1775, %v1531
        %v1810 = vsel %vm1782, %v1777, %v1533
        %v1812 = vsel %vm1782, %v1779, %v1535
        %v1814 = vsel %vm1782, %v1781, %v1537
        %vm1815 = vcmask 228352
        %v1817 = vsel %vm1815, %v1784, %v1551
        %v1819 = vsel %vm1815, %v1786, %v1553
        %v1821 = vsel %vm1815, %v1788, %v1555
        %v1823 = vsel %vm1815, %v1790, %v1557
        %v1825 = vsel %vm1815, %v1792, %v1559
        %v1827 = vsel %vm1815, %v1794, %v1561
        %v1829 = vsel %vm1815, %v1796, %v1563
        %v1831 = vsel %vm1815, %v1798, %v1565
        %v1833 = vsel %vm1815, %v1800, %v1567
        %v1835 = vsel %vm1815, %v1802, %v1569
        %v1837 = vsel %vm1815, %v1804, %v1571
        %v1839 = vsel %vm1815, %v1806, %v1573
        %v1841 = vsel %vm1815, %v1808, %v1575
        %v1843 = vsel %vm1815, %v1810, %v1577
        %v1845 = vsel %vm1815, %v1812, %v1579
        %v1847 = vsel %vm1815, %v1814, %v1581
        %vm1848 = vcmask 261120
        %v1850 = vsel %vm1848, %v1817, %v1587
        %v1852 = vsel %vm1848, %v1819, %v1589
        %v1854 = vsel %vm1848, %v1821, %v1591
        %v1856 = vsel %vm1848, %v1823, %v1593
        %v1858 = vsel %vm1848, %v1825, %v1595
        %v1860 = vsel %vm1848, %v1827, %v1597
        %v1862 = vsel %vm1848, %v1829, %v1599
        %v1864 = vsel %vm1848, %v1831, %v1601
        %v1866 = vsel %vm1848, %v1833, %v1603
        %v1868 = vsel %vm1848, %v1835, %v1605
        %v1870 = vsel %vm1848, %v1837, %v1607
        %v1872 = vsel %vm1848, %v1839, %v1609
        %v1874 = vsel %vm1848, %v1841, %v1611
        %v1876 = vsel %vm1848, %v1843, %v1613
        %v1878 = vsel %vm1848, %v1845, %v1615
        %v1880 = vsel %vm1848, %v1847, %v1617
        %v1881 = vld [vmem:[%s4] sm:$0xf]
        %v1882 = vld [vmem:[%s4 + $0x4] sm:$0xf]
        %v1883 = vld [vmem:[%s4 + $0x8] sm:$0xf]
        %v1884 = vld [vmem:[%s4 + $0xc] sm:$0xf]
        %v1885 = vld [vmem:[%s4 + $0x10] sm:$0x3]
        %v1891 = vunpack.c.l.b16 %v1881
        %v1892 = vunpack.c.l.b16 %v1882
        %v1893 = vunpack.c.l.b16 %v1883
        %v1894 = vunpack.c.l.b16 %v1884
        %v1895 = vunpack.c.l.b16 %v1885
        %v1896 = vpack.c.b16 %v1892, %v1891
        %v1897 = vpack.c.b16 %v1894, %v1893
        %v1898 = vpack.c.b16 %v1895, %v1895
        %vm1901 = vcmask 293888
        %v1902 = vsel %vm1901, %v1850, 0
        %v1904 = vsel %vm1901, %v1852, 0
        %v1906 = vsel %vm1901, %v1854, 0
        %v1908 = vsel %vm1901, %v1856, 0
        %v1910 = vsel %vm1901, %v1858, 0
        %v1912 = vsel %vm1901, %v1860, 0
        %v1914 = vsel %vm1901, %v1862, 0
        %v1916 = vsel %vm1901, %v1864, 0
        %v1918 = vsel %vm1901, %v1866, 0
        %v1920 = vsel %vm1901, %v1868, 0
        %v1922 = vsel %vm1901, %v1870, 0
        %v1924 = vsel %vm1901, %v1872, 0
        %v1926 = vsel %vm1901, %v1874, 0
        %v1928 = vsel %vm1901, %v1876, 0
        %v1930 = vsel %vm1901, %v1878, 0
        %v1932 = vsel %vm1901, %v1880, 0
        %vm1934 = vcmask 1041408
        %v1936 = vsel %vm1934, %v1898, 0
        %1938 = vmatprep.subr.bf16.mxu0 0
        %1939 = vmatpush1.bf16.msra.mxu0 0
        %1940 = vmatprep.subr.bf16.mxu0 0
        %1941 = vmatpush1.bf16.msra.mxu0 0
        %1942 = vmatprep.subr.bf16.mxu0 0
        %1943 = vmatpush1.bf16.msra.mxu0 0
        %1944 = vmatprep.subr.bf16.mxu0 0
        %1945 = vmatpush1.bf16.msra.mxu0 0
        %1946 = vmatprep.subr.bf16.mxu0 0
        %1947 = vmatpush1.bf16.msra.mxu0 0
        %1948 = vmatprep.subr.bf16.mxu0 0
        %1949 = vmatpush1.bf16.msra.mxu0 %v1936
        %1950 = vmatprep.subr.bf16.mxu0 0
        %1951 = vmatpush1.bf16.msra.mxu0 %v1897
        %1952 = vmatprep.subr.bf16.mxu0 0
        %1953 = vmatpush1.bf16.msra.mxu0 %v1896
        %1954 = vmatprep.subr.bf16.mxu0 0
        %1955 = vmatpush2.bf16.msra.mxu0 0
        %1956 = vmatprep.subr.bf16.mxu0 0
        %1957 = vmatpush2.bf16.msra.mxu0 0
        %1958 = vmatprep.subr.bf16.mxu0 0
        %1959 = vmatpush2.bf16.msra.mxu0 0
        %1960 = vmatprep.subr.bf16.mxu0 0
        %1961 = vmatpush2.bf16.msra.mxu0 0
        %1962 = vmatprep.subr.bf16.mxu0 0
        %1963 = vmatpush2.bf16.msra.mxu0 0
        %1964 = vmatprep.subr.bf16.mxu0 0
        %1965 = vmatpush2.bf16.msra.mxu0 0
        %1966 = vmatprep.subr.bf16.mxu0 0
        %1967 = vmatpush2.bf16.msra.mxu0 0
        %1968 = vmatprep.subr.bf16.mxu0 0
        %1969 = vmatpush2.bf16.msra.mxu0 0
        %1970 = vmatprep.mubr.bf16.mxu0 0
        %1971 = vmatmul.mubr.bf16.gmra.mxu0 %v1902
        %v1972 = vpop.f32.mrf.mxu0
        %v1973 = vadd.f32 0.0, %v1972
        %v1974 = vpop.f32.mrf.mxu0
        %v1975 = vpop.f32.mrf.mxu0
        %v1976 = vadd.f32 0.0, %v1975
        %v1977 = vpop.f32.mrf.mxu0
        %1978 = vmatprep.mubr.bf16.mxu0 0
        %1979 = vmatmul.mubr.bf16.gmra.mxu0 %v1904
        %v1980 = vpop.f32.mrf.mxu0
        %v1981 = vadd.f32 0.0, %v1980
        %v1982 = vpop.f32.mrf.mxu0
        %v1983 = vpop.f32.mrf.mxu0
        %v1984 = vadd.f32 0.0, %v1983
        %v1985 = vpop.f32.mrf.mxu0
        %1986 = vmatprep.mubr.bf16.mxu0 0
        %1987 = vmatmul.mubr.bf16.gmra.mxu0 %v1906
        %v1988 = vpop.f32.mrf.mxu0
        %v1989 = vadd.f32 0.0, %v1988
        %v1990 = vpop.f32.mrf.mxu0
        %v1991 = vpop.f32.mrf.mxu0
        %v1992 = vadd.f32 0.0, %v1991
        %v1993 = vpop.f32.mrf.mxu0
        %1994 = vmatprep.mubr.bf16.mxu0 0
        %1995 = vmatmul.mubr.bf16.gmra.mxu0 %v1908
        %v1996 = vpop.f32.mrf.mxu0
        %v1997 = vadd.f32 0.0, %v1996
        %v1998 = vpop.f32.mrf.mxu0
        %v1999 = vpop.f32.mrf.mxu0
        %v2000 = vadd.f32 0.0, %v1999
        %v2001 = vpop.f32.mrf.mxu0
        %2002 = vmatprep.mubr.bf16.mxu0 0
        %2003 = vmatmul.mubr.bf16.gmra.mxu0 %v1910
        %v2004 = vpop.f32.mrf.mxu0
        %v2005 = vadd.f32 0.0, %v2004
        %v2006 = vpop.f32.mrf.mxu0
        %v2007 = vpop.f32.mrf.mxu0
        %v2008 = vadd.f32 0.0, %v2007
        %v2009 = vpop.f32.mrf.mxu0
        %2010 = vmatprep.mubr.bf16.mxu0 0
        %2011 = vmatmul.mubr.bf16.gmra.mxu0 %v1912
        %v2012 = vpop.f32.mrf.mxu0
        %v2013 = vadd.f32 0.0, %v2012
        %v2014 = vpop.f32.mrf.mxu0
        %v2015 = vpop.f32.mrf.mxu0
        %v2016 = vadd.f32 0.0, %v2015
        %v2017 = vpop.f32.mrf.mxu0
        %2018 = vmatprep.mubr.bf16.mxu0 0
        %2019 = vmatmul.mubr.bf16.gmra.mxu0 %v1914
        %v2020 = vpop.f32.mrf.mxu0
        %v2021 = vadd.f32 0.0, %v2020
        %v2022 = vpop.f32.mrf.mxu0
        %v2023 = vpop.f32.mrf.mxu0
        %v2024 = vadd.f32 0.0, %v2023
        %v2025 = vpop.f32.mrf.mxu0
        %2026 = vmatprep.mubr.bf16.mxu0 0
        %2027 = vmatmul.mubr.bf16.gmra.mxu0 %v1916
        %v2028 = vpop.f32.mrf.mxu0
        %v2029 = vadd.f32 0.0, %v2028
        %v2030 = vpop.f32.mrf.mxu0
        %v2031 = vpop.f32.mrf.mxu0
        %v2032 = vadd.f32 0.0, %v2031
        %v2033 = vpop.f32.mrf.mxu0
        %2034 = vmatprep.mubr.bf16.mxu0 0
        %2035 = vmatmul.mubr.bf16.gmra.mxu0 %v1918
        %v2036 = vpop.f32.mrf.mxu0
        %v2037 = vadd.f32 0.0, %v2036
        %v2038 = vpop.f32.mrf.mxu0
        %v2039 = vpop.f32.mrf.mxu0
        %v2040 = vadd.f32 0.0, %v2039
        %v2041 = vpop.f32.mrf.mxu0
        %2042 = vmatprep.mubr.bf16.mxu0 0
        %2043 = vmatmul.mubr.bf16.gmra.mxu0 %v1920
        %v2044 = vpop.f32.mrf.mxu0
        %v2045 = vadd.f32 0.0, %v2044
        %v2046 = vpop.f32.mrf.mxu0
        %v2047 = vpop.f32.mrf.mxu0
        %v2048 = vadd.f32 0.0, %v2047
        %v2049 = vpop.f32.mrf.mxu0
        %2050 = vmatprep.mubr.bf16.mxu0 0
        %2051 = vmatmul.mubr.bf16.gmra.mxu0 %v1922
        %v2052 = vpop.f32.mrf.mxu0
        %v2053 = vadd.f32 0.0, %v2052
        %v2054 = vpop.f32.mrf.mxu0
        %v2055 = vpop.f32.mrf.mxu0
        %v2056 = vadd.f32 0.0, %v2055
        %v2057 = vpop.f32.mrf.mxu0
        %2058 = vmatprep.mubr.bf16.mxu0 0
        %2059 = vmatmul.mubr.bf16.gmra.mxu0 %v1924
        %v2060 = vpop.f32.mrf.mxu0
        %v2061 = vadd.f32 0.0, %v2060
        %v2062 = vpop.f32.mrf.mxu0
        %v2063 = vpop.f32.mrf.mxu0
        %v2064 = vadd.f32 0.0, %v2063
        %v2065 = vpop.f32.mrf.mxu0
        %2066 = vmatprep.mubr.bf16.mxu0 0
        %2067 = vmatmul.mubr.bf16.gmra.mxu0 %v1926
        %v2068 = vpop.f32.mrf.mxu0
        %v2069 = vadd.f32 0.0, %v2068
        %v2070 = vpop.f32.mrf.mxu0
        %v2071 = vpop.f32.mrf.mxu0
        %v2072 = vadd.f32 0.0, %v2071
        %v2073 = vpop.f32.mrf.mxu0
        %2074 = vmatprep.mubr.bf16.mxu0 0
        %2075 = vmatmul.mubr.bf16.gmra.mxu0 %v1928
        %v2076 = vpop.f32.mrf.mxu0
        %v2077 = vadd.f32 0.0, %v2076
        %v2078 = vpop.f32.mrf.mxu0
        %v2079 = vpop.f32.mrf.mxu0
        %v2080 = vadd.f32 0.0, %v2079
        %v2081 = vpop.f32.mrf.mxu0
        %2082 = vmatprep.mubr.bf16.mxu0 0
        %2083 = vmatmul.mubr.bf16.gmra.mxu0 %v1930
        %v2084 = vpop.f32.mrf.mxu0
        %v2085 = vadd.f32 0.0, %v2084
        %v2086 = vpop.f32.mrf.mxu0
        %v2087 = vpop.f32.mrf.mxu0
        %v2088 = vadd.f32 0.0, %v2087
        %v2089 = vpop.f32.mrf.mxu0
        %2090 = vmatprep.mubr.bf16.mxu0 0
        %2091 = vmatmul.mubr.bf16.gmra.mxu0 %v1932
        %v2092 = vpop.f32.mrf.mxu0
        %v2093 = vadd.f32 0.0, %v2092
        %v2094 = vpop.f32.mrf.mxu0
        %v2095 = vpop.f32.mrf.mxu0
        %v2096 = vadd.f32 0.0, %v2095
        %v2097 = vpop.f32.mrf.mxu0
        %2098 = vdwg.mxu0
        %v2099 = vld [vmem:[%s5] sm:$0x1]
        %v2101 = vlaneseq
        %v2102 = vshrl.u32 %v2101, 7
        %v2103 = vsub.s32 0, %v2102
        %v2104 = vrot.slane %v2099, %v2103
        %v2106 = vmul.f32 %v1973, %v2104
        %v2107 = vmul.f32 %v1976, %v2104
        %v2108 = vmul.f32 %v1981, %v2104
        %v2109 = vmul.f32 %v1984, %v2104
        %v2110 = vmul.f32 %v1989, %v2104
        %v2111 = vmul.f32 %v1992, %v2104
        %v2112 = vmul.f32 %v1997, %v2104
        %v2113 = vmul.f32 %v2000, %v2104
        %v2114 = vmul.f32 %v2005, %v2104
        %v2115 = vmul.f32 %v2008, %v2104
        %v2116 = vmul.f32 %v2013, %v2104
        %v2117 = vmul.f32 %v2016, %v2104
        %v2118 = vmul.f32 %v2021, %v2104
        %v2119 = vmul.f32 %v2024, %v2104
        %v2120 = vmul.f32 %v2029, %v2104
        %v2121 = vmul.f32 %v2032, %v2104
        %v2122 = vmul.f32 %v2037, %v2104
        %v2123 = vmul.f32 %v2040, %v2104
        %v2124 = vmul.f32 %v2045, %v2104
        %v2125 = vmul.f32 %v2048, %v2104
        %v2126 = vmul.f32 %v2053, %v2104
        %v2127 = vmul.f32 %v2056, %v2104
        %v2128 = vmul.f32 %v2061, %v2104
        %v2129 = vmul.f32 %v2064, %v2104
        %v2130 = vmul.f32 %v2069, %v2104
        %v2131 = vmul.f32 %v2072, %v2104
        %v2132 = vmul.f32 %v2077, %v2104
        %v2133 = vmul.f32 %v2080, %v2104
        %v2134 = vmul.f32 %v2085, %v2104
        %v2135 = vmul.f32 %v2088, %v2104
        %v2136 = vmul.f32 %v2093, %v2104
        %v2137 = vmul.f32 %v2096, %v2104
        %v2138 = vld [vmem:[%s6] sm:$0x1]
        %v2140 = vlaneseq
        %v2141 = vshrl.u32 %v2140, 7
        %v2142 = vsub.s32 0, %v2141
        %v2143 = vrot.slane %v2138, %v2142
        %v2145 = vadd.f32 %v2106, %v2143
        %v2146 = vadd.f32 %v2107, %v2143
        %v2147 = vadd.f32 %v2108, %v2143
        %v2148 = vadd.f32 %v2109, %v2143
        %v2149 = vadd.f32 %v2110, %v2143
        %v2150 = vadd.f32 %v2111, %v2143
        %v2151 = vadd.f32 %v2112, %v2143
        %v2152 = vadd.f32 %v2113, %v2143
        %v2153 = vadd.f32 %v2114, %v2143
        %v2154 = vadd.f32 %v2115, %v2143
        %v2155 = vadd.f32 %v2116, %v2143
        %v2156 = vadd.f32 %v2117, %v2143
        %v2157 = vadd.f32 %v2118, %v2143
        %v2158 = vadd.f32 %v2119, %v2143
        %v2159 = vadd.f32 %v2120, %v2143
        %v2160 = vadd.f32 %v2121, %v2143
        %v2161 = vadd.f32 %v2122, %v2143
        %v2162 = vadd.f32 %v2123, %v2143
        %v2163 = vadd.f32 %v2124, %v2143
        %v2164 = vadd.f32 %v2125, %v2143
        %v2165 = vadd.f32 %v2126, %v2143
        %v2166 = vadd.f32 %v2127, %v2143
        %v2167 = vadd.f32 %v2128, %v2143
        %v2168 = vadd.f32 %v2129, %v2143
        %v2169 = vadd.f32 %v2130, %v2143
        %v2170 = vadd.f32 %v2131, %v2143
        %v2171 = vadd.f32 %v2132, %v2143
        %v2172 = vadd.f32 %v2133, %v2143
        %v2173 = vadd.f32 %v2134, %v2143
        %v2174 = vadd.f32 %v2135, %v2143
        %v2175 = vadd.f32 %v2136, %v2143
        %v2176 = vadd.f32 %v2137, %v2143
        %v2177 = vmax.f32 %v2145, 0.0
        %v2178 = vmax.f32 %v2146, 0.0
        %v2179 = vmax.f32 %v2147, 0.0
        %v2180 = vmax.f32 %v2148, 0.0
        %v2181 = vmax.f32 %v2149, 0.0
        %v2182 = vmax.f32 %v2150, 0.0
        %v2183 = vmax.f32 %v2151, 0.0
        %v2184 = vmax.f32 %v2152, 0.0
        %v2185 = vmax.f32 %v2153, 0.0
        %v2186 = vmax.f32 %v2154, 0.0
        %v2187 = vmax.f32 %v2155, 0.0
        %v2188 = vmax.f32 %v2156, 0.0
        %v2189 = vmax.f32 %v2157, 0.0
        %v2190 = vmax.f32 %v2158, 0.0
        %v2191 = vmax.f32 %v2159, 0.0
        %v2192 = vmax.f32 %v2160, 0.0
        %v2193 = vmax.f32 %v2161, 0.0
        %v2194 = vmax.f32 %v2162, 0.0
        %v2195 = vmax.f32 %v2163, 0.0
        %v2196 = vmax.f32 %v2164, 0.0
        %v2197 = vmax.f32 %v2165, 0.0
        %v2198 = vmax.f32 %v2166, 0.0
        %v2199 = vmax.f32 %v2167, 0.0
        %v2200 = vmax.f32 %v2168, 0.0
        %v2201 = vmax.f32 %v2169, 0.0
        %v2202 = vmax.f32 %v2170, 0.0
        %v2203 = vmax.f32 %v2171, 0.0
        %v2204 = vmax.f32 %v2172, 0.0
        %v2205 = vmax.f32 %v2173, 0.0
        %v2206 = vmax.f32 %v2174, 0.0
        %v2207 = vmax.f32 %v2175, 0.0
        %v2208 = vmax.f32 %v2176, 0.0
        %v2209 = vpack.c.bf16 %v2178, %v2177
        %v2210 = vpack.c.bf16 %v2180, %v2179
        %v2211 = vpack.c.bf16 %v2182, %v2181
        %v2212 = vpack.c.bf16 %v2184, %v2183
        %v2213 = vpack.c.bf16 %v2186, %v2185
        %v2214 = vpack.c.bf16 %v2188, %v2187
        %v2215 = vpack.c.bf16 %v2190, %v2189
        %v2216 = vpack.c.bf16 %v2192, %v2191
        %v2217 = vpack.c.bf16 %v2194, %v2193
        %v2218 = vpack.c.bf16 %v2196, %v2195
        %v2219 = vpack.c.bf16 %v2198, %v2197
        %v2220 = vpack.c.bf16 %v2200, %v2199
        %v2221 = vpack.c.bf16 %v2202, %v2201
        %v2222 = vpack.c.bf16 %v2204, %v2203
        %v2223 = vpack.c.bf16 %v2206, %v2205
        %v2224 = vpack.c.bf16 %v2208, %v2207
        %v2225 = vld [vmem:[%s7] sm:$0x3]
        %v2227 = vsel %vm1618, %v2209, 0
        %v2230 = vsel %vm1618, %v2210, 0
        %v2233 = vsel %vm1618, %v2211, 0
        %v2236 = vsel %vm1618, %v2212, 0
        %v2239 = vsel %vm1618, %v2213, 0
        %v2242 = vsel %vm1618, %v2214, 0
        %v2245 = vsel %vm1618, %v2215, 0
        %v2248 = vsel %vm1618, %v2216, 0
        %v2251 = vsel %vm1618, %v2217, 0
        %v2254 = vsel %vm1618, %v2218, 0
        %v2257 = vsel %vm1618, %v2219, 0
        %v2260 = vsel %vm1618, %v2220, 0
        %v2263 = vsel %vm1618, %v2221, 0
        %v2266 = vsel %vm1618, %v2222, 0
        %v2269 = vsel %vm1618, %v2223, 0
        %v2272 = vsel %vm1618, %v2224, 0
        %v2275 = vsel %vm1934, %v2225, 0
        %2277 = vmatprep.subr.bf16.mxu0 0
        %2278 = vmatpush1.bf16.msra.mxu0 0
        %2279 = vmatprep.subr.bf16.mxu0 0
        %2280 = vmatpush1.bf16.msra.mxu0 0
        %2281 = vmatprep.subr.bf16.mxu0 0
        %2282 = vmatpush1.bf16.msra.mxu0 0
        %2283 = vmatprep.subr.bf16.mxu0 0
        %2284 = vmatpush1.bf16.msra.mxu0 0
        %2285 = vmatprep.subr.bf16.mxu0 0
        %2286 = vmatpush1.bf16.msra.mxu0 0
        %2287 = vmatprep.subr.bf16.mxu0 0
        %2288 = vmatpush1.bf16.msra.mxu0 0
        %2289 = vmatprep.subr.bf16.mxu0 0
        %2290 = vmatpush1.bf16.msra.mxu0 0
        %2291 = vmatprep.subr.bf16.mxu0 0
        %2292 = vmatpush1.bf16.msra.mxu0 %v2275
        %2293 = vmatprep.subr.bf16.mxu0 0
        %2294 = vmatpush2.bf16.msra.mxu0 0
        %2295 = vmatprep.subr.bf16.mxu0 0
        %2296 = vmatpush2.bf16.msra.mxu0 0
        %2297 = vmatprep.subr.bf16.mxu0 0
        %2298 = vmatpush2.bf16.msra.mxu0 0
        %2299 = vmatprep.subr.bf16.mxu0 0
        %2300 = vmatpush2.bf16.msra.mxu0 0
        %2301 = vmatprep.subr.bf16.mxu0 0
        %2302 = vmatpush2.bf16.msra.mxu0 0
        %2303 = vmatprep.subr.bf16.mxu0 0
        %2304 = vmatpush2.bf16.msra.mxu0 0
        %2305 = vmatprep.subr.bf16.mxu0 0
        %2306 = vmatpush2.bf16.msra.mxu0 0
        %2307 = vmatprep.subr.bf16.mxu0 0
        %2308 = vmatpush2.bf16.msra.mxu0 0
        %2309 = vmatprep.mubr.bf16.mxu0 0
        %2310 = vmatmul.mubr.bf16.gmra.mxu0 %v2227
        %v2311 = vpop.f32.mrf.mxu0
        %v2312 = vadd.f32 0.0, %v2311
        %v2313 = vpop.f32.mrf.mxu0
        %v2314 = vpop.f32.mrf.mxu0
        %v2315 = vadd.f32 0.0, %v2314
        %v2316 = vpop.f32.mrf.mxu0
        %2317 = vmatprep.mubr.bf16.mxu0 0
        %2318 = vmatmul.mubr.bf16.gmra.mxu0 %v2230
        %v2319 = vpop.f32.mrf.mxu0
        %v2320 = vadd.f32 0.0, %v2319
        %v2321 = vpop.f32.mrf.mxu0
        %v2322 = vpop.f32.mrf.mxu0
        %v2323 = vadd.f32 0.0, %v2322
        %v2324 = vpop.f32.mrf.mxu0
        %2325 = vmatprep.mubr.bf16.mxu0 0
        %2326 = vmatmul.mubr.bf16.gmra.mxu0 %v2233
        %v2327 = vpop.f32.mrf.mxu0
        %v2328 = vadd.f32 0.0, %v2327
        %v2329 = vpop.f32.mrf.mxu0
        %v2330 = vpop.f32.mrf.mxu0
        %v2331 = vadd.f32 0.0, %v2330
        %v2332 = vpop.f32.mrf.mxu0
        %2333 = vmatprep.mubr.bf16.mxu0 0
        %2334 = vmatmul.mubr.bf16.gmra.mxu0 %v2236
        %v2335 = vpop.f32.mrf.mxu0
        %v2336 = vadd.f32 0.0, %v2335
        %v2337 = vpop.f32.mrf.mxu0
        %v2338 = vpop.f32.mrf.mxu0
        %v2339 = vadd.f32 0.0, %v2338
        %v2340 = vpop.f32.mrf.mxu0
        %2341 = vmatprep.mubr.bf16.mxu0 0
        %2342 = vmatmul.mubr.bf16.gmra.mxu0 %v2239
        %v2343 = vpop.f32.mrf.mxu0
        %v2344 = vadd.f32 0.0, %v2343
        %v2345 = vpop.f32.mrf.mxu0
        %v2346 = vpop.f32.mrf.mxu0
        %v2347 = vadd.f32 0.0, %v2346
        %v2348 = vpop.f32.mrf.mxu0
        %2349 = vmatprep.mubr.bf16.mxu0 0
        %2350 = vmatmul.mubr.bf16.gmra.mxu0 %v2242
        %v2351 = vpop.f32.mrf.mxu0
        %v2352 = vadd.f32 0.0, %v2351
        %v2353 = vpop.f32.mrf.mxu0
        %v2354 = vpop.f32.mrf.mxu0
        %v2355 = vadd.f32 0.0, %v2354
        %v2356 = vpop.f32.mrf.mxu0
        %2357 = vmatprep.mubr.bf16.mxu0 0
        %2358 = vmatmul.mubr.bf16.gmra.mxu0 %v2245
        %v2359 = vpop.f32.mrf.mxu0
        %v2360 = vadd.f32 0.0, %v2359
        %v2361 = vpop.f32.mrf.mxu0
        %v2362 = vpop.f32.mrf.mxu0
        %v2363 = vadd.f32 0.0, %v2362
        %v2364 = vpop.f32.mrf.mxu0
        %2365 = vmatprep.mubr.bf16.mxu0 0
        %2366 = vmatmul.mubr.bf16.gmra.mxu0 %v2248
        %v2367 = vpop.f32.mrf.mxu0
        %v2368 = vadd.f32 0.0, %v2367
        %v2369 = vpop.f32.mrf.mxu0
        %v2370 = vpop.f32.mrf.mxu0
        %v2371 = vadd.f32 0.0, %v2370
        %v2372 = vpop.f32.mrf.mxu0
        %2373 = vmatprep.mubr.bf16.mxu0 0
        %2374 = vmatmul.mubr.bf16.gmra.mxu0 %v2251
        %v2375 = vpop.f32.mrf.mxu0
        %v2376 = vadd.f32 0.0, %v2375
        %v2377 = vpop.f32.mrf.mxu0
        %v2378 = vpop.f32.mrf.mxu0
        %v2379 = vadd.f32 0.0, %v2378
        %v2380 = vpop.f32.mrf.mxu0
        %2381 = vmatprep.mubr.bf16.mxu0 0
        %2382 = vmatmul.mubr.bf16.gmra.mxu0 %v2254
        %v2383 = vpop.f32.mrf.mxu0
        %v2384 = vadd.f32 0.0, %v2383
        %v2385 = vpop.f32.mrf.mxu0
        %v2386 = vpop.f32.mrf.mxu0
        %v2387 = vadd.f32 0.0, %v2386
        %v2388 = vpop.f32.mrf.mxu0
        %2389 = vmatprep.mubr.bf16.mxu0 0
        %2390 = vmatmul.mubr.bf16.gmra.mxu0 %v2257
        %v2391 = vpop.f32.mrf.mxu0
        %v2392 = vadd.f32 0.0, %v2391
        %v2393 = vpop.f32.mrf.mxu0
        %v2394 = vpop.f32.mrf.mxu0
        %v2395 = vadd.f32 0.0, %v2394
        %v2396 = vpop.f32.mrf.mxu0
        %2397 = vmatprep.mubr.bf16.mxu0 0
        %2398 = vmatmul.mubr.bf16.gmra.mxu0 %v2260
        %v2399 = vpop.f32.mrf.mxu0
        %v2400 = vadd.f32 0.0, %v2399
        %v2401 = vpop.f32.mrf.mxu0
        %v2402 = vpop.f32.mrf.mxu0
        %v2403 = vadd.f32 0.0, %v2402
        %v2404 = vpop.f32.mrf.mxu0
        %2405 = vmatprep.mubr.bf16.mxu0 0
        %2406 = vmatmul.mubr.bf16.gmra.mxu0 %v2263
        %v2407 = vpop.f32.mrf.mxu0
        %v2408 = vadd.f32 0.0, %v2407
        %v2409 = vpop.f32.mrf.mxu0
        %v2410 = vpop.f32.mrf.mxu0
        %v2411 = vadd.f32 0.0, %v2410
        %v2412 = vpop.f32.mrf.mxu0
        %2413 = vmatprep.mubr.bf16.mxu0 0
        %2414 = vmatmul.mubr.bf16.gmra.mxu0 %v2266
        %v2415 = vpop.f32.mrf.mxu0
        %v2416 = vadd.f32 0.0, %v2415
        %v2417 = vpop.f32.mrf.mxu0
        %v2418 = vpop.f32.mrf.mxu0
        %v2419 = vadd.f32 0.0, %v2418
        %v2420 = vpop.f32.mrf.mxu0
        %2421 = vmatprep.mubr.bf16.mxu0 0
        %2422 = vmatmul.mubr.bf16.gmra.mxu0 %v2269
        %v2423 = vpop.f32.mrf.mxu0
        %v2424 = vadd.f32 0.0, %v2423
        %v2425 = vpop.f32.mrf.mxu0
        %v2426 = vpop.f32.mrf.mxu0
        %v2427 = vadd.f32 0.0, %v2426
        %v2428 = vpop.f32.mrf.mxu0
        %2429 = vmatprep.mubr.bf16.mxu0 0
        %2430 = vmatmul.mubr.bf16.gmra.mxu0 %v2272
        %v2431 = vpop.f32.mrf.mxu0
        %v2432 = vadd.f32 0.0, %v2431
        %v2433 = vpop.f32.mrf.mxu0
        %v2434 = vpop.f32.mrf.mxu0
        %v2435 = vadd.f32 0.0, %v2434
        %v2436 = vpop.f32.mrf.mxu0
        %2437 = vdwg.mxu0
        %v2438 = vld [vmem:[%s8] sm:$0x1]
        %v2440 = vlaneseq
        %v2441 = vshrl.u32 %v2440, 7
        %v2442 = vsub.s32 0, %v2441
        %v2443 = vrot.slane %v2438, %v2442
        %v2445 = vmul.f32 %v2312, %v2443
        %v2446 = vmul.f32 %v2315, %v2443
        %v2447 = vmul.f32 %v2320, %v2443
        %v2448 = vmul.f32 %v2323, %v2443
        %v2449 = vmul.f32 %v2328, %v2443
        %v2450 = vmul.f32 %v2331, %v2443
        %v2451 = vmul.f32 %v2336, %v2443
        %v2452 = vmul.f32 %v2339, %v2443
        %v2453 = vmul.f32 %v2344, %v2443
        %v2454 = vmul.f32 %v2347, %v2443
        %v2455 = vmul.f32 %v2352, %v2443
        %v2456 = vmul.f32 %v2355, %v2443
        %v2457 = vmul.f32 %v2360, %v2443
        %v2458 = vmul.f32 %v2363, %v2443
        %v2459 = vmul.f32 %v2368, %v2443
        %v2460 = vmul.f32 %v2371, %v2443
        %v2461 = vmul.f32 %v2376, %v2443
        %v2462 = vmul.f32 %v2379, %v2443
        %v2463 = vmul.f32 %v2384, %v2443
        %v2464 = vmul.f32 %v2387, %v2443
        %v2465 = vmul.f32 %v2392, %v2443
        %v2466 = vmul.f32 %v2395, %v2443
        %v2467 = vmul.f32 %v2400, %v2443
        %v2468 = vmul.f32 %v2403, %v2443
        %v2469 = vmul.f32 %v2408, %v2443
        %v2470 = vmul.f32 %v2411, %v2443
        %v2471 = vmul.f32 %v2416, %v2443
        %v2472 = vmul.f32 %v2419, %v2443
        %v2473 = vmul.f32 %v2424, %v2443
        %v2474 = vmul.f32 %v2427, %v2443
        %v2475 = vmul.f32 %v2432, %v2443
        %v2476 = vmul.f32 %v2435, %v2443
        %v2477 = vld [vmem:[%s9] sm:$0x1]
        %v2479 = vlaneseq
        %v2480 = vshrl.u32 %v2479, 7
        %v2481 = vsub.s32 0, %v2480
        %v2482 = vrot.slane %v2477, %v2481
        %v2484 = vadd.f32 %v2445, %v2482
        %v2485 = vadd.f32 %v2446, %v2482
        %v2486 = vadd.f32 %v2447, %v2482
        %v2487 = vadd.f32 %v2448, %v2482
        %v2488 = vadd.f32 %v2449, %v2482
        %v2489 = vadd.f32 %v2450, %v2482
        %v2490 = vadd.f32 %v2451, %v2482
        %v2491 = vadd.f32 %v2452, %v2482
        %v2492 = vadd.f32 %v2453, %v2482
        %v2493 = vadd.f32 %v2454, %v2482
        %v2494 = vadd.f32 %v2455, %v2482
        %v2495 = vadd.f32 %v2456, %v2482
        %v2496 = vadd.f32 %v2457, %v2482
        %v2497 = vadd.f32 %v2458, %v2482
        %v2498 = vadd.f32 %v2459, %v2482
        %v2499 = vadd.f32 %v2460, %v2482
        %v2500 = vadd.f32 %v2461, %v2482
        %v2501 = vadd.f32 %v2462, %v2482
        %v2502 = vadd.f32 %v2463, %v2482
        %v2503 = vadd.f32 %v2464, %v2482
        %v2504 = vadd.f32 %v2465, %v2482
        %v2505 = vadd.f32 %v2466, %v2482
        %v2506 = vadd.f32 %v2467, %v2482
        %v2507 = vadd.f32 %v2468, %v2482
        %v2508 = vadd.f32 %v2469, %v2482
        %v2509 = vadd.f32 %v2470, %v2482
        %v2510 = vadd.f32 %v2471, %v2482
        %v2511 = vadd.f32 %v2472, %v2482
        %v2512 = vadd.f32 %v2473, %v2482
        %v2513 = vadd.f32 %v2474, %v2482
        %v2514 = vadd.f32 %v2475, %v2482
        %v2515 = vadd.f32 %v2476, %v2482
        %v2516 = vadd.f32 %v2484, %v379
        %v2517 = vadd.f32 %v2485, %v380
        %v2518 = vadd.f32 %v2486, %v381
        %v2519 = vadd.f32 %v2487, %v382
        %v2520 = vadd.f32 %v2488, %v383
        %v2521 = vadd.f32 %v2489, %v384
        %v2522 = vadd.f32 %v2490, %v385
        %v2523 = vadd.f32 %v2491, %v386
        %v2524 = vadd.f32 %v2492, %v387
        %v2525 = vadd.f32 %v2493, %v388
        %v2526 = vadd.f32 %v2494, %v389
        %v2527 = vadd.f32 %v2495, %v390
        %v2528 = vadd.f32 %v2496, %v391
        %v2529 = vadd.f32 %v2497, %v392
        %v2530 = vadd.f32 %v2498, %v393
        %v2531 = vadd.f32 %v2499, %v394
        %v2532 = vadd.f32 %v2500, %v395
        %v2533 = vadd.f32 %v2501, %v396
        %v2534 = vadd.f32 %v2502, %v397
        %v2535 = vadd.f32 %v2503, %v398
        %v2536 = vadd.f32 %v2504, %v399
        %v2537 = vadd.f32 %v2505, %v400
        %v2538 = vadd.f32 %v2506, %v401
        %v2539 = vadd.f32 %v2507, %v402
        %v2540 = vadd.f32 %v2508, %v403
        %v2541 = vadd.f32 %v2509, %v404
        %v2542 = vadd.f32 %v2510, %v405
        %v2543 = vadd.f32 %v2511, %v406
        %v2544 = vadd.f32 %v2512, %v407
        %v2545 = vadd.f32 %v2513, %v408
        %v2546 = vadd.f32 %v2514, %v409
        %v2547 = vadd.f32 %v2515, %v410
        %v2548 = vmax.f32 %v2516, 0.0
        %v2549 = vmax.f32 %v2517, 0.0
        %v2550 = vmax.f32 %v2518, 0.0
        %v2551 = vmax.f32 %v2519, 0.0
        %v2552 = vmax.f32 %v2520, 0.0
        %v2553 = vmax.f32 %v2521, 0.0
        %v2554 = vmax.f32 %v2522, 0.0
        %v2555 = vmax.f32 %v2523, 0.0
        %v2556 = vmax.f32 %v2524, 0.0
        %v2557 = vmax.f32 %v2525, 0.0
        %v2558 = vmax.f32 %v2526, 0.0
        %v2559 = vmax.f32 %v2527, 0.0
        %v2560 = vmax.f32 %v2528, 0.0
        %v2561 = vmax.f32 %v2529, 0.0
        %v2562 = vmax.f32 %v2530, 0.0
        %v2563 = vmax.f32 %v2531, 0.0
        %v2564 = vmax.f32 %v2532, 0.0
        %v2565 = vmax.f32 %v2533, 0.0
        %v2566 = vmax.f32 %v2534, 0.0
        %v2567 = vmax.f32 %v2535, 0.0
        %v2568 = vmax.f32 %v2536, 0.0
        %v2569 = vmax.f32 %v2537, 0.0
        %v2570 = vmax.f32 %v2538, 0.0
        %v2571 = vmax.f32 %v2539, 0.0
        %v2572 = vmax.f32 %v2540, 0.0
        %v2573 = vmax.f32 %v2541, 0.0
        %v2574 = vmax.f32 %v2542, 0.0
        %v2575 = vmax.f32 %v2543, 0.0
        %v2576 = vmax.f32 %v2544, 0.0
        %v2577 = vmax.f32 %v2545, 0.0
        %v2578 = vmax.f32 %v2546, 0.0
        %v2579 = vmax.f32 %v2547, 0.0
        %2580 = vst.msk [vmem:[%s366] sm:$0xff] %vm439, %v2548
        %2581 = vst.msk [vmem:[%s366 + $0x8] sm:$0xff] %vm439, %v2549
        %2582 = vst.msk [vmem:[%s366 + $0x10] sm:$0xff] %vm439, %v2550
        %2583 = vst.msk [vmem:[%s366 + $0x18] sm:$0xff] %vm439, %v2551
        %2584 = vst.msk [vmem:[%s366 + $0x20] sm:$0xff] %vm439, %v2552
        %2585 = vst.msk [vmem:[%s366 + $0x28] sm:$0xff] %vm439, %v2553
        %2586 = vst.msk [vmem:[%s366 + $0x30] sm:$0xff] %vm439, %v2554
        %2587 = vst.msk [vmem:[%s366 + $0x38] sm:$0xff] %vm439, %v2555
        %2588 = vst.msk [vmem:[%s366 + $0x40] sm:$0xff] %vm439, %v2556
        %2589 = vst.msk [vmem:[%s366 + $0x48] sm:$0xff] %vm439, %v2557
        %2590 = vst.msk [vmem:[%s366 + $0x50] sm:$0xff] %vm439, %v2558
        %2591 = vst.msk [vmem:[%s366 + $0x58] sm:$0xff] %vm439, %v2559
        %2592 = vst.msk [vmem:[%s366 + $0x60] sm:$0xff] %vm439, %v2560
        %2593 = vst.msk [vmem:[%s366 + $0x68] sm:$0xff] %vm439, %v2561
        %2594 = vst.msk [vmem:[%s366 + $0x70] sm:$0xff] %vm439, %v2562
        %2595 = vst.msk [vmem:[%s366 + $0x78] sm:$0xff] %vm439, %v2563
        %2596 = vst.msk [vmem:[%s366 + $0x80] sm:$0xff] %vm439, %v2564
        %2597 = vst.msk [vmem:[%s366 + $0x88] sm:$0xff] %vm439, %v2565
        %2598 = vst.msk [vmem:[%s366 + $0x90] sm:$0xff] %vm439, %v2566
        %2599 = vst.msk [vmem:[%s366 + $0x98] sm:$0xff] %vm439, %v2567
        %2600 = vst.msk [vmem:[%s366 + $0xa0] sm:$0xff] %vm439, %v2568
        %2601 = vst.msk [vmem:[%s366 + $0xa8] sm:$0xff] %vm439, %v2569
        %2602 = vst.msk [vmem:[%s366 + $0xb0] sm:$0xff] %vm439, %v2570
        %2603 = vst.msk [vmem:[%s366 + $0xb8] sm:$0xff] %vm439, %v2571
        %2604 = vst.msk [vmem:[%s366 + $0xc0] sm:$0xff] %vm439, %v2572
        %2605 = vst.msk [vmem:[%s366 + $0xc8] sm:$0xff] %vm439, %v2573
        %2606 = vst.msk [vmem:[%s366 + $0xd0] sm:$0xff] %vm439, %v2574
        %2607 = vst.msk [vmem:[%s366 + $0xd8] sm:$0xff] %vm439, %v2575
        %2608 = vst.msk [vmem:[%s366 + $0xe0] sm:$0xff] %vm439, %v2576
        %2609 = vst.msk [vmem:[%s366 + $0xe8] sm:$0xff] %vm439, %v2577
        %2610 = vst.msk [vmem:[%s366 + $0xf0] sm:$0xff] %vm439, %v2578
        %2611 = vst.msk [vmem:[%s366 + $0xf8] sm:$0xff] %vm439, %v2579
        %s2612 = sand.u32 %s261, 1
        %s2613 = scalar_lea.sflag [#allocation3], %s2612
        %s2614 = sand.u32 %s261, 1
        %s2615 = smul.addr %s2614, 256
        %s2616 = scalar_lea.vmem [#allocation2], %s2615
        // Predicated region
        $region61: #{tpu_custom_call.1} parent=59 // pred_check
          %p2617 = pneg %p271
        $region62: #{tpu_custom_call.1} parent=59 // pred_check_branch
          %2619 = sbr.rel (%p2617) target = $region64
        $region63: #{tpu_custom_call.1} parent=59 // pred_region
          %s2620 = smul.u32 16, %s29
          %s2622 = ssub.s32 4096, 4096
          %2623 = vsyncadd %s2613, %s2622
          %s2624 = smul.addr %s2620, 2
          %s2625 = smul.addr %s28, 32
          %s2626 = sadd.s32 %s2624, %s2625
          %s2627 = smul.addr %s2626, 128
          %s2628 = scalar_lea.hbm %s10, %s2627
          %s2629 = sshll.u32 %s2616, 4
          %s2630 = int_to_ptr.vmem [resolvable:$true] %s2629
          %2635 = dma.vmem_to_hbm [thread:$0]  %s2630, 4096, %s2628, %s2613, 128, 128, 8
        $region64: #{tpu_custom_call.1} parent=59 // pred_fallthru
          _
      $region60: #{tpu_custom_call.1} parent=5 // pred_fallthru
        _
      %p2636 = scmp.le.s32.totalorder 2, %s19
      // Predicated region
      $region65: #{tpu_custom_call.1} parent=5 // pred_check
        %p2637 = pneg %p2636
      $region66: #{tpu_custom_call.1} parent=5 // pred_check_branch
        %2639 = sbr.rel (%p2637) target = $region68
      $region67: #{tpu_custom_call.1} parent=5 // pred_region
        %s2640 = ssub.s32 %s19, 2
        // Predicated region
        $region69: #{tpu_custom_call.1} parent=67 // pred_check
          %p2641 = pneg %p277
        $region70: #{tpu_custom_call.1} parent=67 // pred_check_branch
          %2643 = sbr.rel (%p2641) target = $region72
        $region71: #{tpu_custom_call.1} parent=67 // pred_region
          %s2644 = sand.u32 %s262, 1
          %s2645 = scalar_lea.sflag [#allocation3], %s2644
          %s2646 = sand.u32 %s262, 1
          %s2647 = smul.addr %s2646, 256
          %s2648 = scalar_lea.vmem [#allocation2], %s2647
          %2649 = dma.done %s2645, 4096
        $region72: #{tpu_custom_call.1} parent=67 // pred_fallthru
          _
      $region68: #{tpu_custom_call.1} parent=5 // pred_fallthru
        _
    $region6: #{tpu_custom_call.1} parent=1 // loop_footer
      %s23 = sadd.s32 1, %s19
    $region7: #{tpu_custom_call.1} parent=1 // loop_footer_branch
      %18 = sbr.rel target = $region3
    $region8: #{tpu_custom_call.1} parent=1 // loop_exit
      _
    %2650 = vsyncpa [#allocation3], 1
    %s2651 = scalar_lea.sflag [#allocation3], 1
    %2652 = vsyncpa %s2651, 1

</llo_original>
